<compile_context>
chip_gen: v6e
topology: v6e:2x2x1
jax: 0.10.0
libtpu: 0.0.40
codegen_flags: <defaults>
</compile_context>

<pallas_src>
import jax
import jax.numpy as jnp
from jax.experimental import pallas as pl
from jax.experimental.pallas import tpu as pltpu

TILE = (8, 128)
NUM_UNIFORM_TILES = 25     # one bulk host draw, sliced per consumer
NUM_F32_RESULTS = 16       # float-valued sampled tensors
NUM_I32_RESULTS = 3        # multinomial, randint, randperm

_TWO_PI = 6.283185307179586
_INV_LOG_HALF = -1.4426950408889634      # 1 / log(0.5)  (geometric_ p=0.5)
_RANDOM_MAX = 16777216.0                 # 2**24, torch float32 .random_() range
_MULTINOMIAL_THRESHOLD = 12905551        # round(2**24 * 10/13): P(first == 1) = 10/13


def sampling_kernel(scal_ref, u_ref, f_out, i_out):
    lane = jax.lax.broadcasted_iota(jnp.int32, TILE, 1)

    def U(i):
        return u_ref[i]                  # (8, 128) uniform [0, 1) tile

    # a = torch.empty(3, 3).uniform_(0.0, 1.0)
    a = U(0)

    # --- torch.bernoulli(a) ------------------------------------------------
    f_out[0] = (U(1) < a).astype(jnp.float32)

    # --- paired Box-Muller #1: one (u1,u2) draw feeds TWO normal consumers --
    u1, u2 = U(2), U(3)
    rad = jnp.sqrt(-2.0 * jnp.log(1.0 - u1))     # u1 < 1, no clamp needed
    th = _TWO_PI * u2
    n_a = rad * jnp.cos(th)
    n_b = rad * jnp.sin(th)

    # torch.normal(2.0, 3.0, (1, 4))
    f_out[1] = 2.0 + 3.0 * n_a
    # torch.randn_like(a) -- cached second Box-Muller output
    f_out[7] = n_b

    # --- torch.poisson(a): Knuth, lambda = a < 1 so 8 steps suffice ---------
    # (P(K >= 8) ~ 1e-8 for lambda < 1; tail truncation is negligible.)
    L = jnp.exp(-a)
    p = jnp.ones(TILE, jnp.float32)
    k = jnp.zeros(TILE, jnp.float32)
    for t in range(8):
        p = p * U(4 + t)
        k = k + (p > L).astype(jnp.float32)
    f_out[2] = k

    # --- torch.rand(2, 3) / torch.rand_like(a) ------------------------------
    f_out[3] = U(12)
    f_out[4] = U(13)

    # --- torch.randint(10, (1, 4)) ------------------------------------------
    i_out[1] = (U(14) * 10.0).astype(jnp.int32)
    # --- torch.randint_like(a, 4)  (float dtype, integer values) ------------
    f_out[5] = jnp.floor(U(15) * 4.0)
    # --- torch.rand(4) -------------------------------------------------------
    f_out[6] = U(16)

    # --- torch.multinomial([0, 10, 3, 0], 2) without replacement ------------
    # Constant weights: result is always a permutation of {1, 2} with
    # P(first == 1) = 10/13.  One scalar uniform decides the order.
    mu = scal_ref[4]
    first = jnp.where(mu < _MULTINOMIAL_THRESHOLD, 1, 2).astype(jnp.int32)
    second = (3 - first).astype(jnp.int32)
    i_out[0] = jnp.where(lane == 0, first,
                         jnp.where(lane == 1, second, 0)).astype(jnp.int32)

    # --- torch.randperm(4): ranks of 4 random integer keys ------------------
    # Scalar SMEM compares (no full-tile reductions); lt/le tie-break
    # guarantees the ranks are always a valid permutation of {0,1,2,3}.
    k0, k1, k2, k3 = scal_ref[0], scal_ref[1], scal_ref[2], scal_ref[3]
    lt = lambda x, y: jnp.where(x < y, 1, 0)
    le = lambda x, y: jnp.where(x <= y, 1, 0)
    r0 = lt(k1, k0) + lt(k2, k0) + lt(k3, k0)
    r1 = le(k0, k1) + lt(k2, k1) + lt(k3, k1)
    r2 = le(k0, k2) + le(k1, k2) + lt(k3, k2)
    r3 = le(k0, k3) + le(k1, k3) + le(k2, k3)
    i_out[2] = jnp.where(lane == 0, r0,
               jnp.where(lane == 1, r1,
               jnp.where(lane == 2, r2,
               jnp.where(lane == 3, r3, 0)))).astype(jnp.int32)

    # --- in-place distribution fills on `a` (each overwrites a) -------------
    # a.bernoulli_()  (default p = 0.5)
    f_out[8] = (U(17) < 0.5).astype(jnp.float32)
    # a.cauchy_(median=0, sigma=1): tan(pi*(u - 0.5)) as sin/cos ratio
    ang = _TWO_PI * 0.5 * (U(18) - 0.5)
    f_out[9] = jnp.sin(ang) / jnp.cos(ang)
    # a.exponential_(lambd=1): -log(1 - u)
    f_out[10] = -jnp.log(1.0 - U(19))
    # a.geometric_(0.5): floor(log(1-u)/log(0.5)) + 1  (constant multiply)
    f_out[11] = jnp.floor(jnp.log(1.0 - U(20)) * _INV_LOG_HALF) + 1.0
    # --- paired Box-Muller #2 feeds log_normal_ and normal_ ------------------
    u3, u4 = U(21), U(22)
    rad2 = jnp.sqrt(-2.0 * jnp.log(1.0 - u3))
    th2 = _TWO_PI * u4
    n_c = rad2 * jnp.cos(th2)
    n_d = rad2 * jnp.sin(th2)
    # a.log_normal_(mean=1, std=2)
    f_out[12] = jnp.exp(1.0 + 2.0 * n_c)
    # a.normal_(mean=0, std=1)
    f_out[13] = n_d
    # a.random_()  (float32 -> uniform integers in [0, 2^24))
    f_out[14] = jnp.floor(U(23) * _RANDOM_MAX)
    # a.uniform_()
    f_out[15] = U(24)


def sampling_forward(key):
    """Run the Pallas sampling kernel; returns (count, dict_of_results)."""
    ku, ks = jax.random.split(key)
    # One bulk entropy draw (applies the "batch the PRNG" feedback).
    uniforms = jax.random.uniform(ku, (NUM_UNIFORM_TILES,) + TILE,
                                  dtype=jnp.float32)
    scalars = jax.random.randint(ks, (8,), 0, 2 ** 24, dtype=jnp.int32)

    f_out, i_out = pl.pallas_call(
        sampling_kernel,
        out_shape=(
            jax.ShapeDtypeStruct((NUM_F32_RESULTS,) + TILE, jnp.float32),
            jax.ShapeDtypeStruct((NUM_I32_RESULTS,) + TILE, jnp.int32),
        ),
        in_specs=[
            pl.BlockSpec(memory_space=pltpu.MemorySpace.SMEM),
            pl.BlockSpec(memory_space=pltpu.MemorySpace.VMEM),
        ],
        out_specs=(
            pl.BlockSpec(memory_space=pltpu.MemorySpace.VMEM),
            pl.BlockSpec(memory_space=pltpu.MemorySpace.VMEM),
        ),
    )(scalars, uniforms)

    results = {
        "bernoulli":      f_out[0, :3, :3],     # (3, 3)
        "multinomial":    i_out[0, 0, :2],      # (2,)
        "normal":         f_out[1, :1, :4],     # (1, 4)
        "poisson":        f_out[2, :3, :3],     # (3, 3)
        "rand_2x3":       f_out[3, :2, :3],     # (2, 3)
        "rand_like":      f_out[4, :3, :3],     # (3, 3)
        "randint":        i_out[1, :1, :4],     # (1, 4)
        "randint_like":   f_out[5, :3, :3],     # (3, 3)
        "rand_4":         f_out[6, 0, :4],      # (4,)
        "randn_like":     f_out[7, :3, :3],     # (3, 3)
        "randperm":       i_out[2, 0, :4],      # (4,)
        "a_bernoulli_":   f_out[8, :3, :3],
        "a_cauchy_":      f_out[9, :3, :3],
        "a_exponential_": f_out[10, :3, :3],
        "a_geometric_":   f_out[11, :3, :3],
        "a_log_normal_":  f_out[12, :3, :3],
        "a_normal_":      f_out[13, :3, :3],
        "a_random_":      f_out[14, :3, :3],
        "a_uniform_":     f_out[15, :3, :3],
    }
    # The torch module returns len(<19 sampled tensors>).
    # TODO(synk): torch's exact Philox/MT19937 RNG streams are not reproducible
    # here; distributions/shapes/dtypes match instead.
    return len(results), results


if __name__ == "__main__":
    import numpy as np

    key = jax.random.PRNGKey(0)
    count, results = sampling_forward(key)
    results = jax.block_until_ready(results)

    # Light sanity checks on the sampled tensors.
    assert count == 19
    assert results["bernoulli"].shape == (3, 3)
    assert results["normal"].shape == (1, 4)
    assert results["rand_2x3"].shape == (2, 3)
    assert results["randint"].shape == (1, 4)
    assert results["multinomial"].shape == (2,)
    assert results["randperm"].shape == (4,)
    assert set(np.asarray(results["randperm"]).tolist()) == {0, 1, 2, 3}
    assert set(np.asarray(results["multinomial"]).tolist()) == {1, 2}
    b = np.asarray(results["bernoulli"])
    assert np.all((b == 0.0) | (b == 1.0))
    ri = np.asarray(results["randint"])
    assert np.all((ri >= 0) & (ri < 10))
    assert np.all(np.asarray(results["a_geometric_"]) >= 1.0)
    pois = np.asarray(results["poisson"])
    assert np.all((pois >= 0.0) & (pois <= 8.0))
    u = np.asarray(results["a_uniform_"])
    assert np.all((u >= 0.0) & (u < 1.0))

    print("KERNEL_OK")
</pallas_src>

<mosaic_0001>
module attributes {stable_mosaic.version = 11 : i64} {
  func.func @sampling_kernel(%arg0: memref<8xi32, #tpu.memory_space<smem>>, %arg1: memref<25x8x128xf32, #tpu.memory_space<vmem>>, %arg2: memref<16x8x128xf32, #tpu.memory_space<vmem>>, %arg3: memref<3x8x128xi32, #tpu.memory_space<vmem>>) attributes {dimension_semantics = [], scalar_prefetch = 0 : i64, scratch_operands = 0 : i64, tpu.core_type = #tpu.core_type<tc>} {
    %0 = tpu.iota {dimensions = array<i32: 1>} : vector<8x128xi32>
    %c0 = arith.constant 0 : index
    %c0_0 = arith.constant 0 : index
    %c0_1 = arith.constant 0 : index
    %1 = vector.load %arg1[%c0, %c0_0, %c0_1] : memref<25x8x128xf32, #tpu.memory_space<vmem>>, vector<1x8x128xf32>
    %2 = vector.shape_cast %1 : vector<1x8x128xf32> to vector<8x128xf32>
    %c1 = arith.constant 1 : index
    %c0_2 = arith.constant 0 : index
    %c0_3 = arith.constant 0 : index
    %3 = vector.load %arg1[%c1, %c0_2, %c0_3] : memref<25x8x128xf32, #tpu.memory_space<vmem>>, vector<1x8x128xf32>
    %4 = vector.shape_cast %3 : vector<1x8x128xf32> to vector<8x128xf32>
    %5 = arith.cmpf olt, %4, %2 : vector<8x128xf32>
    %6 = arith.extui %5 : vector<8x128xi1> to vector<8x128xi32>
    %7 = arith.sitofp %6 : vector<8x128xi32> to vector<8x128xf32>
    %c0_4 = arith.constant 0 : index
    %c0_5 = arith.constant 0 : index
    %c0_6 = arith.constant 0 : index
    %8 = vector.load %arg2[%c0_4, %c0_5, %c0_6] : memref<16x8x128xf32, #tpu.memory_space<vmem>>, vector<1x8x128xf32>
    %9 = vector.shape_cast %8 : vector<1x8x128xf32> to vector<8x128xf32>
    %10 = vector.shape_cast %7 : vector<8x128xf32> to vector<1x8x128xf32>
    tpu.vector_store %arg2[%c0_4, %c0_5, %c0_6], %10 {strides = array<i32>} : memref<16x8x128xf32, #tpu.memory_space<vmem>>, vector<1x8x128xf32>,
    %c2 = arith.constant 2 : index
    %c0_7 = arith.constant 0 : index
    %c0_8 = arith.constant 0 : index
    %11 = vector.load %arg1[%c2, %c0_7, %c0_8] : memref<25x8x128xf32, #tpu.memory_space<vmem>>, vector<1x8x128xf32>
    %12 = vector.shape_cast %11 : vector<1x8x128xf32> to vector<8x128xf32>
    %c3 = arith.constant 3 : index
    %c0_9 = arith.constant 0 : index
    %c0_10 = arith.constant 0 : index
    %13 = vector.load %arg1[%c3, %c0_9, %c0_10] : memref<25x8x128xf32, #tpu.memory_space<vmem>>, vector<1x8x128xf32>
    %14 = vector.shape_cast %13 : vector<1x8x128xf32> to vector<8x128xf32>
    %cst = arith.constant 1.000000e+00 : f32
    %15 = vector.broadcast %cst : f32 to vector<8x128xf32>
    %16 = arith.subf %15, %12 : vector<8x128xf32>
    %17 = math.log %16 : vector<8x128xf32>
    %cst_11 = arith.constant -2.000000e+00 : f32
    %18 = vector.broadcast %cst_11 : f32 to vector<8x128xf32>
    %19 = arith.mulf %18, %17 : vector<8x128xf32>
    %20 = math.sqrt %19 : vector<8x128xf32>
    %cst_12 = arith.constant 6.28318548 : f32
    %21 = vector.broadcast %cst_12 : f32 to vector<8x128xf32>
    %22 = arith.mulf %21, %14 : vector<8x128xf32>
    %23 = math.cos %22 : vector<8x128xf32>
    %24 = arith.mulf %20, %23 : vector<8x128xf32>
    %25 = math.sin %22 : vector<8x128xf32>
    %26 = arith.mulf %20, %25 : vector<8x128xf32>
    %cst_13 = arith.constant 3.000000e+00 : f32
    %27 = vector.broadcast %cst_13 : f32 to vector<8x128xf32>
    %28 = arith.mulf %27, %24 : vector<8x128xf32>
    %cst_14 = arith.constant 2.000000e+00 : f32
    %29 = vector.broadcast %cst_14 : f32 to vector<8x128xf32>
    %30 = arith.addf %29, %28 : vector<8x128xf32>
    %c1_15 = arith.constant 1 : index
    %c0_16 = arith.constant 0 : index
    %c0_17 = arith.constant 0 : index
    %31 = vector.load %arg2[%c1_15, %c0_16, %c0_17] : memref<16x8x128xf32, #tpu.memory_space<vmem>>, vector<1x8x128xf32>
    %32 = vector.shape_cast %31 : vector<1x8x128xf32> to vector<8x128xf32>
    %33 = vector.shape_cast %30 : vector<8x128xf32> to vector<1x8x128xf32>
    tpu.vector_store %arg2[%c1_15, %c0_16, %c0_17], %33 {strides = array<i32>} : memref<16x8x128xf32, #tpu.memory_space<vmem>>, vector<1x8x128xf32>,
    %c7 = arith.constant 7 : index
    %c0_18 = arith.constant 0 : index
    %c0_19 = arith.constant 0 : index
    %34 = vector.load %arg2[%c7, %c0_18, %c0_19] : memref<16x8x128xf32, #tpu.memory_space<vmem>>, vector<1x8x128xf32>
    %35 = vector.shape_cast %34 : vector<1x8x128xf32> to vector<8x128xf32>
    %36 = vector.shape_cast %26 : vector<8x128xf32> to vector<1x8x128xf32>
    tpu.vector_store %arg2[%c7, %c0_18, %c0_19], %36 {strides = array<i32>} : memref<16x8x128xf32, #tpu.memory_space<vmem>>, vector<1x8x128xf32>,
    %cst_20 = arith.constant 0.000000e+00 : f32
    %37 = vector.broadcast %cst_20 : f32 to vector<8x128xf32>
    %38 = arith.subf %37, %2 : vector<8x128xf32>
    %39 = math.exp %38 : vector<8x128xf32>
    %cst_21 = arith.constant 1.000000e+00 : f32
    %40 = vector.broadcast %cst_21 : f32 to vector<8x128xf32>
    %cst_22 = arith.constant 0.000000e+00 : f32
    %41 = vector.broadcast %cst_22 : f32 to vector<8x128xf32>
    %c4 = arith.constant 4 : index
    %c0_23 = arith.constant 0 : index
    %c0_24 = arith.constant 0 : index
    %42 = vector.load %arg1[%c4, %c0_23, %c0_24] : memref<25x8x128xf32, #tpu.memory_space<vmem>>, vector<1x8x128xf32>
    %43 = vector.shape_cast %42 : vector<1x8x128xf32> to vector<8x128xf32>
    %44 = arith.mulf %40, %43 : vector<8x128xf32>
    %45 = arith.cmpf ogt, %44, %39 : vector<8x128xf32>
    %46 = arith.extui %45 : vector<8x128xi1> to vector<8x128xi32>
    %47 = arith.sitofp %46 : vector<8x128xi32> to vector<8x128xf32>
    %48 = arith.addf %41, %47 : vector<8x128xf32>
    %c5 = arith.constant 5 : index
    %c0_25 = arith.constant 0 : index
    %c0_26 = arith.constant 0 : index
    %49 = vector.load %arg1[%c5, %c0_25, %c0_26] : memref<25x8x128xf32, #tpu.memory_space<vmem>>, vector<1x8x128xf32>
    %50 = vector.shape_cast %49 : vector<1x8x128xf32> to vector<8x128xf32>
    %51 = arith.mulf %44, %50 : vector<8x128xf32>
    %52 = arith.cmpf ogt, %51, %39 : vector<8x128xf32>
    %53 = arith.extui %52 : vector<8x128xi1> to vector<8x128xi32>
    %54 = arith.sitofp %53 : vector<8x128xi32> to vector<8x128xf32>
    %55 = arith.addf %48, %54 : vector<8x128xf32>
    %c6 = arith.constant 6 : index
    %c0_27 = arith.constant 0 : index
    %c0_28 = arith.constant 0 : index
    %56 = vector.load %arg1[%c6, %c0_27, %c0_28] : memref<25x8x128xf32, #tpu.memory_space<vmem>>, vector<1x8x128xf32>
    %57 = vector.shape_cast %56 : vector<1x8x128xf32> to vector<8x128xf32>
    %58 = arith.mulf %51, %57 : vector<8x128xf32>
    %59 = arith.cmpf ogt, %58, %39 : vector<8x128xf32>
    %60 = arith.extui %59 : vector<8x128xi1> to vector<8x128xi32>
    %61 = arith.sitofp %60 : vector<8x128xi32> to vector<8x128xf32>
    %62 = arith.addf %55, %61 : vector<8x128xf32>
    %c7_29 = arith.constant 7 : index
    %c0_30 = arith.constant 0 : index
    %c0_31 = arith.constant 0 : index
    %63 = vector.load %arg1[%c7_29, %c0_30, %c0_31] : memref<25x8x128xf32, #tpu.memory_space<vmem>>, vector<1x8x128xf32>
    %64 = vector.shape_cast %63 : vector<1x8x128xf32> to vector<8x128xf32>
    %65 = arith.mulf %58, %64 : vector<8x128xf32>
    %66 = arith.cmpf ogt, %65, %39 : vector<8x128xf32>
    %67 = arith.extui %66 : vector<8x128xi1> to vector<8x128xi32>
    %68 = arith.sitofp %67 : vector<8x128xi32> to vector<8x128xf32>
    %69 = arith.addf %62, %68 : vector<8x128xf32>
    %c8 = arith.constant 8 : index
    %c0_32 = arith.constant 0 : index
    %c0_33 = arith.constant 0 : index
    %70 = vector.load %arg1[%c8, %c0_32, %c0_33] : memref<25x8x128xf32, #tpu.memory_space<vmem>>, vector<1x8x128xf32>
    %71 = vector.shape_cast %70 : vector<1x8x128xf32> to vector<8x128xf32>
    %72 = arith.mulf %65, %71 : vector<8x128xf32>
    %73 = arith.cmpf ogt, %72, %39 : vector<8x128xf32>
    %74 = arith.extui %73 : vector<8x128xi1> to vector<8x128xi32>
    %75 = arith.sitofp %74 : vector<8x128xi32> to vector<8x128xf32>
    %76 = arith.addf %69, %75 : vector<8x128xf32>
    %c9 = arith.constant 9 : index
    %c0_34 = arith.constant 0 : index
    %c0_35 = arith.constant 0 : index
    %77 = vector.load %arg1[%c9, %c0_34, %c0_35] : memref<25x8x128xf32, #tpu.memory_space<vmem>>, vector<1x8x128xf32>
    %78 = vector.shape_cast %77 : vector<1x8x128xf32> to vector<8x128xf32>
    %79 = arith.mulf %72, %78 : vector<8x128xf32>
    %80 = arith.cmpf ogt, %79, %39 : vector<8x128xf32>
    %81 = arith.extui %80 : vector<8x128xi1> to vector<8x128xi32>
    %82 = arith.sitofp %81 : vector<8x128xi32> to vector<8x128xf32>
    %83 = arith.addf %76, %82 : vector<8x128xf32>
    %c10 = arith.constant 10 : index
    %c0_36 = arith.constant 0 : index
    %c0_37 = arith.constant 0 : index
    %84 = vector.load %arg1[%c10, %c0_36, %c0_37] : memref<25x8x128xf32, #tpu.memory_space<vmem>>, vector<1x8x128xf32>
    %85 = vector.shape_cast %84 : vector<1x8x128xf32> to vector<8x128xf32>
    %86 = arith.mulf %79, %85 : vector<8x128xf32>
    %87 = arith.cmpf ogt, %86, %39 : vector<8x128xf32>
    %88 = arith.extui %87 : vector<8x128xi1> to vector<8x128xi32>
    %89 = arith.sitofp %88 : vector<8x128xi32> to vector<8x128xf32>
    %90 = arith.addf %83, %89 : vector<8x128xf32>
    %c11 = arith.constant 11 : index
    %c0_38 = arith.constant 0 : index
    %c0_39 = arith.constant 0 : index
    %91 = vector.load %arg1[%c11, %c0_38, %c0_39] : memref<25x8x128xf32, #tpu.memory_space<vmem>>, vector<1x8x128xf32>
    %92 = vector.shape_cast %91 : vector<1x8x128xf32> to vector<8x128xf32>
    %93 = arith.mulf %86, %92 : vector<8x128xf32>
    %94 = arith.cmpf ogt, %93, %39 : vector<8x128xf32>
    %95 = arith.extui %94 : vector<8x128xi1> to vector<8x128xi32>
    %96 = arith.sitofp %95 : vector<8x128xi32> to vector<8x128xf32>
    %97 = arith.addf %90, %96 : vector<8x128xf32>
    %c2_40 = arith.constant 2 : index
    %c0_41 = arith.constant 0 : index
    %c0_42 = arith.constant 0 : index
    %98 = vector.load %arg2[%c2_40, %c0_41, %c0_42] : memref<16x8x128xf32, #tpu.memory_space<vmem>>, vector<1x8x128xf32>
    %99 = vector.shape_cast %98 : vector<1x8x128xf32> to vector<8x128xf32>
    %100 = vector.shape_cast %97 : vector<8x128xf32> to vector<1x8x128xf32>
    tpu.vector_store %arg2[%c2_40, %c0_41, %c0_42], %100 {strides = array<i32>} : memref<16x8x128xf32, #tpu.memory_space<vmem>>, vector<1x8x128xf32>,
    %c12 = arith.constant 12 : index
    %c0_43 = arith.constant 0 : index
    %c0_44 = arith.constant 0 : index
    %101 = vector.load %arg1[%c12, %c0_43, %c0_44] : memref<25x8x128xf32, #tpu.memory_space<vmem>>, vector<1x8x128xf32>
    %102 = vector.shape_cast %101 : vector<1x8x128xf32> to vector<8x128xf32>
    %c3_45 = arith.constant 3 : index
    %c0_46 = arith.constant 0 : index
    %c0_47 = arith.constant 0 : index
    %103 = vector.load %arg2[%c3_45, %c0_46, %c0_47] : memref<16x8x128xf32, #tpu.memory_space<vmem>>, vector<1x8x128xf32>
    %104 = vector.shape_cast %103 : vector<1x8x128xf32> to vector<8x128xf32>
    %105 = vector.shape_cast %102 : vector<8x128xf32> to vector<1x8x128xf32>
    tpu.vector_store %arg2[%c3_45, %c0_46, %c0_47], %105 {strides = array<i32>} : memref<16x8x128xf32, #tpu.memory_space<vmem>>, vector<1x8x128xf32>,
    %c13 = arith.constant 13 : index
    %c0_48 = arith.constant 0 : index
    %c0_49 = arith.constant 0 : index
    %106 = vector.load %arg1[%c13, %c0_48, %c0_49] : memref<25x8x128xf32, #tpu.memory_space<vmem>>, vector<1x8x128xf32>
    %107 = vector.shape_cast %106 : vector<1x8x128xf32> to vector<8x128xf32>
    %c4_50 = arith.constant 4 : index
    %c0_51 = arith.constant 0 : index
    %c0_52 = arith.constant 0 : index
    %108 = vector.load %arg2[%c4_50, %c0_51, %c0_52] : memref<16x8x128xf32, #tpu.memory_space<vmem>>, vector<1x8x128xf32>
    %109 = vector.shape_cast %108 : vector<1x8x128xf32> to vector<8x128xf32>
    %110 = vector.shape_cast %107 : vector<8x128xf32> to vector<1x8x128xf32>
    tpu.vector_store %arg2[%c4_50, %c0_51, %c0_52], %110 {strides = array<i32>} : memref<16x8x128xf32, #tpu.memory_space<vmem>>, vector<1x8x128xf32>,
    %c14 = arith.constant 14 : index
    %c0_53 = arith.constant 0 : index
    %c0_54 = arith.constant 0 : index
    %111 = vector.load %arg1[%c14, %c0_53, %c0_54] : memref<25x8x128xf32, #tpu.memory_space<vmem>>, vector<1x8x128xf32>
    %112 = vector.shape_cast %111 : vector<1x8x128xf32> to vector<8x128xf32>
    %cst_55 = arith.constant 1.000000e+01 : f32
    %113 = vector.broadcast %cst_55 : f32 to vector<8x128xf32>
    %114 = arith.mulf %112, %113 : vector<8x128xf32>
    %115 = arith.fptosi %114 : vector<8x128xf32> to vector<8x128xi32>
    %c1_56 = arith.constant 1 : index
    %c0_57 = arith.constant 0 : index
    %c0_58 = arith.constant 0 : index
    %116 = vector.load %arg3[%c1_56, %c0_57, %c0_58] : memref<3x8x128xi32, #tpu.memory_space<vmem>>, vector<1x8x128xi32>
    %117 = vector.shape_cast %116 : vector<1x8x128xi32> to vector<8x128xi32>
    %118 = vector.shape_cast %115 : vector<8x128xi32> to vector<1x8x128xi32>
    tpu.vector_store %arg3[%c1_56, %c0_57, %c0_58], %118 {strides = array<i32>} : memref<3x8x128xi32, #tpu.memory_space<vmem>>, vector<1x8x128xi32>,
    %c15 = arith.constant 15 : index
    %c0_59 = arith.constant 0 : index
    %c0_60 = arith.constant 0 : index
    %119 = vector.load %arg1[%c15, %c0_59, %c0_60] : memref<25x8x128xf32, #tpu.memory_space<vmem>>, vector<1x8x128xf32>
    %120 = vector.shape_cast %119 : vector<1x8x128xf32> to vector<8x128xf32>
    %cst_61 = arith.constant 4.000000e+00 : f32
    %121 = vector.broadcast %cst_61 : f32 to vector<8x128xf32>
    %122 = arith.mulf %120, %121 : vector<8x128xf32>
    %123 = math.floor %122 : vector<8x128xf32>
    %c5_62 = arith.constant 5 : index
    %c0_63 = arith.constant 0 : index
    %c0_64 = arith.constant 0 : index
    %124 = vector.load %arg2[%c5_62, %c0_63, %c0_64] : memref<16x8x128xf32, #tpu.memory_space<vmem>>, vector<1x8x128xf32>
    %125 = vector.shape_cast %124 : vector<1x8x128xf32> to vector<8x128xf32>
    %126 = vector.shape_cast %123 : vector<8x128xf32> to vector<1x8x128xf32>
    tpu.vector_store %arg2[%c5_62, %c0_63, %c0_64], %126 {strides = array<i32>} : memref<16x8x128xf32, #tpu.memory_space<vmem>>, vector<1x8x128xf32>,
    %c16 = arith.constant 16 : index
    %c0_65 = arith.constant 0 : index
    %c0_66 = arith.constant 0 : index
    %127 = vector.load %arg1[%c16, %c0_65, %c0_66] : memref<25x8x128xf32, #tpu.memory_space<vmem>>, vector<1x8x128xf32>
    %128 = vector.shape_cast %127 : vector<1x8x128xf32> to vector<8x128xf32>
    %c6_67 = arith.constant 6 : index
    %c0_68 = arith.constant 0 : index
    %c0_69 = arith.constant 0 : index
    %129 = vector.load %arg2[%c6_67, %c0_68, %c0_69] : memref<16x8x128xf32, #tpu.memory_space<vmem>>, vector<1x8x128xf32>
    %130 = vector.shape_cast %129 : vector<1x8x128xf32> to vector<8x128xf32>
    %131 = vector.shape_cast %128 : vector<8x128xf32> to vector<1x8x128xf32>
    tpu.vector_store %arg2[%c6_67, %c0_68, %c0_69], %131 {strides = array<i32>} : memref<16x8x128xf32, #tpu.memory_space<vmem>>, vector<1x8x128xf32>,
    %c4_70 = arith.constant 4 : index
    %132 = memref.load %arg0[%c4_70] : memref<8xi32, #tpu.memory_space<smem>>
    %c12905551_i32 = arith.constant 12905551 : i32
    %133 = arith.cmpi slt, %132, %c12905551_i32 : i32
    %c1_i32 = arith.constant 1 : i32
    %c2_i32 = arith.constant 2 : i32
    %134 = arith.select %133, %c1_i32, %c2_i32 : i32
    %c3_i32 = arith.constant 3 : i32
    %135 = arith.subi %c3_i32, %134 : i32
    %c0_i32 = arith.constant 0 : i32
    %136 = vector.broadcast %c0_i32 : i32 to vector<8x128xi32>
    %137 = arith.cmpi eq, %0, %136 : vector<8x128xi32>
    %c1_i32_71 = arith.constant 1 : i32
    %138 = vector.broadcast %c1_i32_71 : i32 to vector<8x128xi32>
    %139 = arith.cmpi eq, %0, %138 : vector<8x128xi32>
    %c0_i32_72 = arith.constant 0 : i32
    %140 = vector.broadcast %135 : i32 to vector<8x128xi32>
    %141 = vector.broadcast %c0_i32_72 : i32 to vector<8x128xi32>
    %142 = arith.select %139, %140, %141 : vector<8x128xi1>, vector<8x128xi32>
    %143 = vector.broadcast %134 : i32 to vector<8x128xi32>
    %144 = arith.select %137, %143, %142 : vector<8x128xi1>, vector<8x128xi32>
    %c0_73 = arith.constant 0 : index
    %c0_74 = arith.constant 0 : index
    %c0_75 = arith.constant 0 : index
    %145 = vector.load %arg3[%c0_73, %c0_74, %c0_75] : memref<3x8x128xi32, #tpu.memory_space<vmem>>, vector<1x8x128xi32>
    %146 = vector.shape_cast %145 : vector<1x8x128xi32> to vector<8x128xi32>
    %147 = vector.shape_cast %144 : vector<8x128xi32> to vector<1x8x128xi32>
    tpu.vector_store %arg3[%c0_73, %c0_74, %c0_75], %147 {strides = array<i32>} : memref<3x8x128xi32, #tpu.memory_space<vmem>>, vector<1x8x128xi32>,
    %c0_76 = arith.constant 0 : index
    %148 = memref.load %arg0[%c0_76] : memref<8xi32, #tpu.memory_space<smem>>
    %c1_77 = arith.constant 1 : index
    %149 = memref.load %arg0[%c1_77] : memref<8xi32, #tpu.memory_space<smem>>
    %c2_78 = arith.constant 2 : index
    %150 = memref.load %arg0[%c2_78] : memref<8xi32, #tpu.memory_space<smem>>
    %c3_79 = arith.constant 3 : index
    %151 = memref.load %arg0[%c3_79] : memref<8xi32, #tpu.memory_space<smem>>
    %152 = arith.cmpi slt, %149, %148 : i32
    %c1_i32_80 = arith.constant 1 : i32
    %c0_i32_81 = arith.constant 0 : i32
    %153 = arith.select %152, %c1_i32_80, %c0_i32_81 : i32
    %154 = arith.cmpi slt, %150, %148 : i32
    %c1_i32_82 = arith.constant 1 : i32
    %c0_i32_83 = arith.constant 0 : i32
    %155 = arith.select %154, %c1_i32_82, %c0_i32_83 : i32
    %156 = arith.addi %153, %155 : i32
    %157 = arith.cmpi slt, %151, %148 : i32
    %c1_i32_84 = arith.constant 1 : i32
    %c0_i32_85 = arith.constant 0 : i32
    %158 = arith.select %157, %c1_i32_84, %c0_i32_85 : i32
    %159 = arith.addi %156, %158 : i32
    %160 = arith.cmpi sle, %148, %149 : i32
    %c1_i32_86 = arith.constant 1 : i32
    %c0_i32_87 = arith.constant 0 : i32
    %161 = arith.select %160, %c1_i32_86, %c0_i32_87 : i32
    %162 = arith.cmpi slt, %150, %149 : i32
    %c1_i32_88 = arith.constant 1 : i32
    %c0_i32_89 = arith.constant 0 : i32
    %163 = arith.select %162, %c1_i32_88, %c0_i32_89 : i32
    %164 = arith.addi %161, %163 : i32
    %165 = arith.cmpi slt, %151, %149 : i32
    %c1_i32_90 = arith.constant 1 : i32
    %c0_i32_91 = arith.constant 0 : i32
    %166 = arith.select %165, %c1_i32_90, %c0_i32_91 : i32
    %167 = arith.addi %164, %166 : i32
    %168 = arith.cmpi sle, %148, %150 : i32
    %c1_i32_92 = arith.constant 1 : i32
    %c0_i32_93 = arith.constant 0 : i32
    %169 = arith.select %168, %c1_i32_92, %c0_i32_93 : i32
    %170 = arith.cmpi sle, %149, %150 : i32
    %c1_i32_94 = arith.constant 1 : i32
    %c0_i32_95 = arith.constant 0 : i32
    %171 = arith.select %170, %c1_i32_94, %c0_i32_95 : i32
    %172 = arith.addi %169, %171 : i32
    %173 = arith.cmpi slt, %151, %150 : i32
    %c1_i32_96 = arith.constant 1 : i32
    %c0_i32_97 = arith.constant 0 : i32
    %174 = arith.select %173, %c1_i32_96, %c0_i32_97 : i32
    %175 = arith.addi %172, %174 : i32
    %176 = arith.cmpi sle, %148, %151 : i32
    %c1_i32_98 = arith.constant 1 : i32
    %c0_i32_99 = arith.constant 0 : i32
    %177 = arith.select %176, %c1_i32_98, %c0_i32_99 : i32
    %178 = arith.cmpi sle, %149, %151 : i32
    %c1_i32_100 = arith.constant 1 : i32
    %c0_i32_101 = arith.constant 0 : i32
    %179 = arith.select %178, %c1_i32_100, %c0_i32_101 : i32
    %180 = arith.addi %177, %179 : i32
    %181 = arith.cmpi sle, %150, %151 : i32
    %c1_i32_102 = arith.constant 1 : i32
    %c0_i32_103 = arith.constant 0 : i32
    %182 = arith.select %181, %c1_i32_102, %c0_i32_103 : i32
    %183 = arith.addi %180, %182 : i32
    %c0_i32_104 = arith.constant 0 : i32
    %184 = vector.broadcast %c0_i32_104 : i32 to vector<8x128xi32>
    %185 = arith.cmpi eq, %0, %184 : vector<8x128xi32>
    %c1_i32_105 = arith.constant 1 : i32
    %186 = vector.broadcast %c1_i32_105 : i32 to vector<8x128xi32>
    %187 = arith.cmpi eq, %0, %186 : vector<8x128xi32>
    %c2_i32_106 = arith.constant 2 : i32
    %188 = vector.broadcast %c2_i32_106 : i32 to vector<8x128xi32>
    %189 = arith.cmpi eq, %0, %188 : vector<8x128xi32>
    %c3_i32_107 = arith.constant 3 : i32
    %190 = vector.broadcast %c3_i32_107 : i32 to vector<8x128xi32>
    %191 = arith.cmpi eq, %0, %190 : vector<8x128xi32>
    %c0_i32_108 = arith.constant 0 : i32
    %192 = vector.broadcast %183 : i32 to vector<8x128xi32>
    %193 = vector.broadcast %c0_i32_108 : i32 to vector<8x128xi32>
    %194 = arith.select %191, %192, %193 : vector<8x128xi1>, vector<8x128xi32>
    %195 = vector.broadcast %175 : i32 to vector<8x128xi32>
    %196 = arith.select %189, %195, %194 : vector<8x128xi1>, vector<8x128xi32>
    %197 = vector.broadcast %167 : i32 to vector<8x128xi32>
    %198 = arith.select %187, %197, %196 : vector<8x128xi1>, vector<8x128xi32>
    %199 = vector.broadcast %159 : i32 to vector<8x128xi32>
    %200 = arith.select %185, %199, %198 : vector<8x128xi1>, vector<8x128xi32>
    %c2_109 = arith.constant 2 : index
    %c0_110 = arith.constant 0 : index
    %c0_111 = arith.constant 0 : index
    %201 = vector.load %arg3[%c2_109, %c0_110, %c0_111] : memref<3x8x128xi32, #tpu.memory_space<vmem>>, vector<1x8x128xi32>
    %202 = vector.shape_cast %201 : vector<1x8x128xi32> to vector<8x128xi32>
    %203 = vector.shape_cast %200 : vector<8x128xi32> to vector<1x8x128xi32>
    tpu.vector_store %arg3[%c2_109, %c0_110, %c0_111], %203 {strides = array<i32>} : memref<3x8x128xi32, #tpu.memory_space<vmem>>, vector<1x8x128xi32>,
    %c17 = arith.constant 17 : index
    %c0_112 = arith.constant 0 : index
    %c0_113 = arith.constant 0 : index
    %204 = vector.load %arg1[%c17, %c0_112, %c0_113] : memref<25x8x128xf32, #tpu.memory_space<vmem>>, vector<1x8x128xf32>
    %205 = vector.shape_cast %204 : vector<1x8x128xf32> to vector<8x128xf32>
    %cst_114 = arith.constant 5.000000e-01 : f32
    %206 = vector.broadcast %cst_114 : f32 to vector<8x128xf32>
    %207 = arith.cmpf olt, %205, %206 : vector<8x128xf32>
    %208 = arith.extui %207 : vector<8x128xi1> to vector<8x128xi32>
    %209 = arith.sitofp %208 : vector<8x128xi32> to vector<8x128xf32>
    %c8_115 = arith.constant 8 : index
    %c0_116 = arith.constant 0 : index
    %c0_117 = arith.constant 0 : index
    %210 = vector.load %arg2[%c8_115, %c0_116, %c0_117] : memref<16x8x128xf32, #tpu.memory_space<vmem>>, vector<1x8x128xf32>
    %211 = vector.shape_cast %210 : vector<1x8x128xf32> to vector<8x128xf32>
    %212 = vector.shape_cast %209 : vector<8x128xf32> to vector<1x8x128xf32>
    tpu.vector_store %arg2[%c8_115, %c0_116, %c0_117], %212 {strides = array<i32>} : memref<16x8x128xf32, #tpu.memory_space<vmem>>, vector<1x8x128xf32>,
    %c18 = arith.constant 18 : index
    %c0_118 = arith.constant 0 : index
    %c0_119 = arith.constant 0 : index
    %213 = vector.load %arg1[%c18, %c0_118, %c0_119] : memref<25x8x128xf32, #tpu.memory_space<vmem>>, vector<1x8x128xf32>
    %214 = vector.shape_cast %213 : vector<1x8x128xf32> to vector<8x128xf32>
    %cst_120 = arith.constant 5.000000e-01 : f32
    %215 = vector.broadcast %cst_120 : f32 to vector<8x128xf32>
    %216 = arith.subf %214, %215 : vector<8x128xf32>
    %cst_121 = arith.constant 3.14159274 : f32
    %217 = vector.broadcast %cst_121 : f32 to vector<8x128xf32>
    %218 = arith.mulf %217, %216 : vector<8x128xf32>
    %219 = math.sin %218 : vector<8x128xf32>
    %220 = math.cos %218 : vector<8x128xf32>
    %221 = arith.divf %219, %220 : vector<8x128xf32>
    %c9_122 = arith.constant 9 : index
    %c0_123 = arith.constant 0 : index
    %c0_124 = arith.constant 0 : index
    %222 = vector.load %arg2[%c9_122, %c0_123, %c0_124] : memref<16x8x128xf32, #tpu.memory_space<vmem>>, vector<1x8x128xf32>
    %223 = vector.shape_cast %222 : vector<1x8x128xf32> to vector<8x128xf32>
    %224 = vector.shape_cast %221 : vector<8x128xf32> to vector<1x8x128xf32>
    tpu.vector_store %arg2[%c9_122, %c0_123, %c0_124], %224 {strides = array<i32>} : memref<16x8x128xf32, #tpu.memory_space<vmem>>, vector<1x8x128xf32>,
    %c19 = arith.constant 19 : index
    %c0_125 = arith.constant 0 : index
    %c0_126 = arith.constant 0 : index
    %225 = vector.load %arg1[%c19, %c0_125, %c0_126] : memref<25x8x128xf32, #tpu.memory_space<vmem>>, vector<1x8x128xf32>
    %226 = vector.shape_cast %225 : vector<1x8x128xf32> to vector<8x128xf32>
    %cst_127 = arith.constant 1.000000e+00 : f32
    %227 = vector.broadcast %cst_127 : f32 to vector<8x128xf32>
    %228 = arith.subf %227, %226 : vector<8x128xf32>
    %229 = math.log %228 : vector<8x128xf32>
    %cst_128 = arith.constant 0.000000e+00 : f32
    %230 = vector.broadcast %cst_128 : f32 to vector<8x128xf32>
    %231 = arith.subf %230, %229 : vector<8x128xf32>
    %c10_129 = arith.constant 10 : index
    %c0_130 = arith.constant 0 : index
    %c0_131 = arith.constant 0 : index
    %232 = vector.load %arg2[%c10_129, %c0_130, %c0_131] : memref<16x8x128xf32, #tpu.memory_space<vmem>>, vector<1x8x128xf32>
    %233 = vector.shape_cast %232 : vector<1x8x128xf32> to vector<8x128xf32>
    %234 = vector.shape_cast %231 : vector<8x128xf32> to vector<1x8x128xf32>
    tpu.vector_store %arg2[%c10_129, %c0_130, %c0_131], %234 {strides = array<i32>} : memref<16x8x128xf32, #tpu.memory_space<vmem>>, vector<1x8x128xf32>,
    %c20 = arith.constant 20 : index
    %c0_132 = arith.constant 0 : index
    %c0_133 = arith.constant 0 : index
    %235 = vector.load %arg1[%c20, %c0_132, %c0_133] : memref<25x8x128xf32, #tpu.memory_space<vmem>>, vector<1x8x128xf32>
    %236 = vector.shape_cast %235 : vector<1x8x128xf32> to vector<8x128xf32>
    %cst_134 = arith.constant 1.000000e+00 : f32
    %237 = vector.broadcast %cst_134 : f32 to vector<8x128xf32>
    %238 = arith.subf %237, %236 : vector<8x128xf32>
    %239 = math.log %238 : vector<8x128xf32>
    %cst_135 = arith.constant -1.44269502 : f32
    %240 = vector.broadcast %cst_135 : f32 to vector<8x128xf32>
    %241 = arith.mulf %239, %240 : vector<8x128xf32>
    %242 = math.floor %241 : vector<8x128xf32>
    %cst_136 = arith.constant 1.000000e+00 : f32
    %243 = vector.broadcast %cst_136 : f32 to vector<8x128xf32>
    %244 = arith.addf %242, %243 : vector<8x128xf32>
    %c11_137 = arith.constant 11 : index
    %c0_138 = arith.constant 0 : index
    %c0_139 = arith.constant 0 : index
    %245 = vector.load %arg2[%c11_137, %c0_138, %c0_139] : memref<16x8x128xf32, #tpu.memory_space<vmem>>, vector<1x8x128xf32>
    %246 = vector.shape_cast %245 : vector<1x8x128xf32> to vector<8x128xf32>
    %247 = vector.shape_cast %244 : vector<8x128xf32> to vector<1x8x128xf32>
    tpu.vector_store %arg2[%c11_137, %c0_138, %c0_139], %247 {strides = array<i32>} : memref<16x8x128xf32, #tpu.memory_space<vmem>>, vector<1x8x128xf32>,
    %c21 = arith.constant 21 : index
    %c0_140 = arith.constant 0 : index
    %c0_141 = arith.constant 0 : index
    %248 = vector.load %arg1[%c21, %c0_140, %c0_141] : memref<25x8x128xf32, #tpu.memory_space<vmem>>, vector<1x8x128xf32>
    %249 = vector.shape_cast %248 : vector<1x8x128xf32> to vector<8x128xf32>
    %c22 = arith.constant 22 : index
    %c0_142 = arith.constant 0 : index
    %c0_143 = arith.constant 0 : index
    %250 = vector.load %arg1[%c22, %c0_142, %c0_143] : memref<25x8x128xf32, #tpu.memory_space<vmem>>, vector<1x8x128xf32>
    %251 = vector.shape_cast %250 : vector<1x8x128xf32> to vector<8x128xf32>
    %cst_144 = arith.constant 1.000000e+00 : f32
    %252 = vector.broadcast %cst_144 : f32 to vector<8x128xf32>
    %253 = arith.subf %252, %249 : vector<8x128xf32>
    %254 = math.log %253 : vector<8x128xf32>
    %cst_145 = arith.constant -2.000000e+00 : f32
    %255 = vector.broadcast %cst_145 : f32 to vector<8x128xf32>
    %256 = arith.mulf %255, %254 : vector<8x128xf32>
    %257 = math.sqrt %256 : vector<8x128xf32>
    %cst_146 = arith.constant 6.28318548 : f32
    %258 = vector.broadcast %cst_146 : f32 to vector<8x128xf32>
    %259 = arith.mulf %258, %251 : vector<8x128xf32>
    %260 = math.cos %259 : vector<8x128xf32>
    %261 = arith.mulf %257, %260 : vector<8x128xf32>
    %262 = math.sin %259 : vector<8x128xf32>
    %263 = arith.mulf %257, %262 : vector<8x128xf32>
    %cst_147 = arith.constant 2.000000e+00 : f32
    %264 = vector.broadcast %cst_147 : f32 to vector<8x128xf32>
    %265 = arith.mulf %264, %261 : vector<8x128xf32>
    %cst_148 = arith.constant 1.000000e+00 : f32
    %266 = vector.broadcast %cst_148 : f32 to vector<8x128xf32>
    %267 = arith.addf %266, %265 : vector<8x128xf32>
    %268 = math.exp %267 : vector<8x128xf32>
    %c12_149 = arith.constant 12 : index
    %c0_150 = arith.constant 0 : index
    %c0_151 = arith.constant 0 : index
    %269 = vector.load %arg2[%c12_149, %c0_150, %c0_151] : memref<16x8x128xf32, #tpu.memory_space<vmem>>, vector<1x8x128xf32>
    %270 = vector.shape_cast %269 : vector<1x8x128xf32> to vector<8x128xf32>
    %271 = vector.shape_cast %268 : vector<8x128xf32> to vector<1x8x128xf32>
    tpu.vector_store %arg2[%c12_149, %c0_150, %c0_151], %271 {strides = array<i32>} : memref<16x8x128xf32, #tpu.memory_space<vmem>>, vector<1x8x128xf32>,
    %c13_152 = arith.constant 13 : index
    %c0_153 = arith.constant 0 : index
    %c0_154 = arith.constant 0 : index
    %272 = vector.load %arg2[%c13_152, %c0_153, %c0_154] : memref<16x8x128xf32, #tpu.memory_space<vmem>>, vector<1x8x128xf32>
    %273 = vector.shape_cast %272 : vector<1x8x128xf32> to vector<8x128xf32>
    %274 = vector.shape_cast %263 : vector<8x128xf32> to vector<1x8x128xf32>
    tpu.vector_store %arg2[%c13_152, %c0_153, %c0_154], %274 {strides = array<i32>} : memref<16x8x128xf32, #tpu.memory_space<vmem>>, vector<1x8x128xf32>,
    %c23 = arith.constant 23 : index
    %c0_155 = arith.constant 0 : index
    %c0_156 = arith.constant 0 : index
    %275 = vector.load %arg1[%c23, %c0_155, %c0_156] : memref<25x8x128xf32, #tpu.memory_space<vmem>>, vector<1x8x128xf32>
    %276 = vector.shape_cast %275 : vector<1x8x128xf32> to vector<8x128xf32>
    %cst_157 = arith.constant 0x4B800000 : f32
    %277 = vector.broadcast %cst_157 : f32 to vector<8x128xf32>
    %278 = arith.mulf %276, %277 : vector<8x128xf32>
    %279 = math.floor %278 : vector<8x128xf32>
    %c14_158 = arith.constant 14 : index
    %c0_159 = arith.constant 0 : index
    %c0_160 = arith.constant 0 : index
    %280 = vector.load %arg2[%c14_158, %c0_159, %c0_160] : memref<16x8x128xf32, #tpu.memory_space<vmem>>, vector<1x8x128xf32>
    %281 = vector.shape_cast %280 : vector<1x8x128xf32> to vector<8x128xf32>
    %282 = vector.shape_cast %279 : vector<8x128xf32> to vector<1x8x128xf32>
    tpu.vector_store %arg2[%c14_158, %c0_159, %c0_160], %282 {strides = array<i32>} : memref<16x8x128xf32, #tpu.memory_space<vmem>>, vector<1x8x128xf32>,
    %c24 = arith.constant 24 : index
    %c0_161 = arith.constant 0 : index
    %c0_162 = arith.constant 0 : index
    %283 = vector.load %arg1[%c24, %c0_161, %c0_162] : memref<25x8x128xf32, #tpu.memory_space<vmem>>, vector<1x8x128xf32>
    %284 = vector.shape_cast %283 : vector<1x8x128xf32> to vector<8x128xf32>
    %c15_163 = arith.constant 15 : index
    %c0_164 = arith.constant 0 : index
    %c0_165 = arith.constant 0 : index
    %285 = vector.load %arg2[%c15_163, %c0_164, %c0_165] : memref<16x8x128xf32, #tpu.memory_space<vmem>>, vector<1x8x128xf32>
    %286 = vector.shape_cast %285 : vector<1x8x128xf32> to vector<8x128xf32>
    %287 = vector.shape_cast %284 : vector<8x128xf32> to vector<1x8x128xf32>
    tpu.vector_store %arg2[%c15_163, %c0_164, %c0_165], %287 {strides = array<i32>} : memref<16x8x128xf32, #tpu.memory_space<vmem>>, vector<1x8x128xf32>,
    return
  }
}

</mosaic_0001>

<llo_original>
// kernel: tpu_custom_call.1
$region0: #{tpu_custom_call.1}
  #allocation0 [shape = 'u32[]', space=smem, size = 0x4, offset = 0x4, fixed_abs, tag = 'smem constant byte address 0x4 - core index']
  #allocation1 [shape = 'u32[144,128]{1,0:T(1,128)}', space=vmem, size = 0x12000, scoped, tag = 'internal scratch']
  %s0 = inlined_call_operand.hbm [shape: s32[8], index: 0, kind: input, shape index: {}]
  %s1 = inlined_call_operand.hbm [shape: f32[25,8,128], index: 1, kind: input, shape index: {}]
  %s2 = inlined_call_operand.hbm [shape: f32[16,8,128], index: 2, kind: output, shape index: {0}]
  %s3 = inlined_call_operand.hbm [shape: s32[3,8,128], index: 3, kind: output, shape index: {1}]
  %4 = xla_tuple %s2, %s3
  %s5 = sld [smem:[#allocation0]]
  $region34: #{tpu_custom_call.1} parent=0
    _
  %s7 = ssub.s32 1, %s5
  %s8 = scalar_select 0, %s7, %s5
  $region1: #{tpu_custom_call.1} parent=0
    #allocation2 [shape = 'u8[512]{0}', space=smem, size = 0x200, scoped, tag = 'input window, operand 0, single buffered']
    #allocation3 [shape = 's32[1]{0}', space=sflag, size = 0x4, scoped, tag = 'scoped memory for tpu_custom_call.1']
    #allocation4 [shape = 's32[1]{0}', space=sflag, size = 0x4, scoped, tag = 'scoped memory for tpu_custom_call.1']
    #allocation5 [shape = 's32[1]{0}', space=sflag, size = 0x4, scoped, tag = 'scoped memory for tpu_custom_call.1']
    #allocation6 [shape = 'u8[102400]{0}', space=vmem, size = 0x19000, scoped, tag = 'input window, operand 1, single buffered']
    #allocation7 [shape = 'u8[65536]{0}', space=vmem, size = 0x10000, scoped, tag = 'output window, operand 0, single buffered']
    #allocation8 [shape = 'u8[12288]{0}', space=vmem, size = 0x3000, scoped, tag = 'output window, operand 1, single buffered']
    #allocation9 [shape = 's32[1]{0}', space=sflag, size = 0x4, scoped, tag = 'scoped memory for tpu_custom_call.1']
    %9 = vsyncpa [#allocation5], 0
    %10 = vsyncpa [#allocation3], 0
    %11 = vsyncpa [#allocation4], 0
    %12 = vsyncpa [#allocation9], 0
    // Predicated region
    $region2: #{tpu_custom_call.1} parent=1 // pred_check
      _
    $region3: #{tpu_custom_call.1} parent=1 // pred_check_branch
      %14 = sbr.rel (0) target = $region5
    $region4: #{tpu_custom_call.1} parent=1 // pred_region
      %s16 = ssub.s32 16, 16
      %17 = vsyncadd [#allocation5], %s16
      %20 = dma.hbm_to_smem %s0, 16, [#allocation2], [#allocation5]
    $region5: #{tpu_custom_call.1} parent=1 // pred_fallthru
      _
    // Predicated region
    $region6: #{tpu_custom_call.1} parent=1 // pred_check
      _
    $region7: #{tpu_custom_call.1} parent=1 // pred_check_branch
      %22 = sbr.rel (0) target = $region9
    $region8: #{tpu_custom_call.1} parent=1 // pred_region
      %s24 = ssub.s32 3200, 3200
      %25 = vsyncadd [#allocation3], %s24
      %s26 = sshll.u32 [#allocation6], 4
      %s27 = int_to_ptr.vmem [resolvable:$true] %s26
      %32 = dma.hbm_to_vmem [thread:$0]  %s1, 3200, %s27, [#allocation3], 128, 128, 8
    $region9: #{tpu_custom_call.1} parent=1 // pred_fallthru
      _
    // Predicated region
    $region10: #{tpu_custom_call.1} parent=1 // pred_check
      _
    $region11: #{tpu_custom_call.1} parent=1 // pred_check_branch
      %34 = sbr.rel (0) target = $region13
    $region12: #{tpu_custom_call.1} parent=1 // pred_region
      %35 = dma.done [#allocation5], 16
    $region13: #{tpu_custom_call.1} parent=1 // pred_fallthru
      _
    // Predicated region
    $region14: #{tpu_custom_call.1} parent=1 // pred_check
      _
    $region15: #{tpu_custom_call.1} parent=1 // pred_check_branch
      %37 = sbr.rel (0) target = $region17
    $region16: #{tpu_custom_call.1} parent=1 // pred_region
      %38 = dma.done [#allocation3], 3200
    $region17: #{tpu_custom_call.1} parent=1 // pred_fallthru
      _
    %39 = sfence
    %v40 = vlaneseq
    %v41 = vand.u32 %v40, 127
    %v42 = vld [vmem:[#allocation6] sm:$0xff]
    %s43 = scalar_lea.vmem [#allocation6], 8
    %v44 = vld [vmem:[%s43] sm:$0xff]
    %vm45 = vcmp.lt.f32.partialorder %v44, %v42
    %v46 = vsel %vm45, 1, 0
    %v47 = vcvt.s32.f32 %v46
    %48 = vst [vmem:[#allocation7] sm:$0xff] %v47
    %s49 = scalar_lea.vmem [#allocation6], 16
    %v50 = vld [vmem:[%s49] sm:$0xff]
    %s51 = scalar_lea.vmem [#allocation6], 24
    %v52 = vld [vmem:[%s51] sm:$0xff]
    %v53 = vsub.f32 1.0, %v50
    %v54 = vlog2.pop %v53
    %v55 = vmul.f32 %v54, 0.6931472
    %v56 = vmul.f32 %v55, -2.0
    %v57 = vrsqrt.pop %v56
    %v58 = vmul.f32 %v56, %v57
    %vm59 = vcmp.eq.f32.partialorder %v56, inf
    %v60 = vsel %vm59, %v56, %v58
    %vm61 = vcmp.eq.f32.partialorder %v56, 0.0
    %v62 = vand.u32 %v56, 2147483648
    %v63 = vsel %vm61, %v62, %v60
    %v64 = vmul.f32 %v52, 6.2831855
    %v65 = vand.u32 2147483647, %v64
    %vm66 = vcmp.le.f32.partialorder %v65, 0.7853982
    %vm67 = vcmp.lt.s32.totalorder %v64, 0
    %v68 = vand.u32 %v64, 2139095040
    %v69 = vshrl.u32 %v68, 23
    %v70 = vsub.s32 %v69, 127
    %v71 = vand.u32 2147483647, %v64
    %v72 = vand.u32 %v71, 8388607
    %v73 = vor.u32 %v72, 8388608
    %v74 = vsub.s32 0, %v73
    %v75 = vadd.s32 %v70, 1
    %vm76 = vcmp.gt.s32.totalorder %v75, 0
    %v77 = vsel %vm76, %v75, 0
    %v78 = vshrl.u32 %v77, 5
    %v79 = vand.u32 %v77, 31
    %v80 = vsub.s32 32, %v79
    %v81 = vshrl.u32 683565275, %v80
    %v82 = vshll.u32 683565275, %v79
    %v83 = vshrl.u32 2475754826, %v80
    %v84 = vor.u32 %v82, %v83
    %v85 = vshll.u32 2475754826, %v79
    %v86 = vshrl.u32 2131351028, %v80
    %v87 = vor.u32 %v85, %v86
    %v88 = vshll.u32 2131351028, %v79
    %v89 = vshrl.u32 2102212464, %v80
    %v90 = vor.u32 %v88, %v89
    %v91 = vshll.u32 2102212464, %v79
    %v92 = vshrl.u32 920167782, %v80
    %v93 = vor.u32 %v91, %v92
    %v94 = vshll.u32 920167782, %v79
    %v95 = vshrl.u32 1326507024, %v80
    %v96 = vor.u32 %v94, %v95
    %vm97 = vcmp.lt.s32.totalorder %v78, 1
    %vm98 = vcmp.lt.s32.totalorder %v78, 2
    %vm99 = vcmp.lt.s32.totalorder %v78, 3
    %vm100 = vcmp.lt.s32.totalorder %v78, 4
    %v101 = vsel %vm97, %v81, %v84
    %v102 = vsel %vm100, %v90, 2102212464
    %v103 = vsel %vm99, %v87, %v102
    %v104 = vsel %vm98, %v101, %v103
    %v105 = vsel %vm97, %v84, %v87
    %v106 = vsel %vm100, %v93, 920167782
    %v107 = vsel %vm99, %v90, %v106
    %v108 = vsel %vm98, %v105, %v107
    %v109 = vsel %vm97, %v87, %v90
    %v110 = vsel %vm100, %v96, 1326507024
    %v111 = vsel %vm99, %v93, %v110
    %v112 = vsel %vm98, %v109, %v111
    %v113 = vshll.u32 %v73, 8
    %v114 = vmul.u32.u64.compose %v113, %v112
    %v115 = vextract.low.u32 %v114
    %v116 = vextract.high.u32 %v114
    %v117 = vmul.u32.u64.compose %v113, %v108
    %v118 = vextract.low.u32 %v117
    %v119 = vextract.high.u32 %v117
    %v120 = vmul.u32 %v113, %v104
    %v121 = vadd.s32 %v116, %v118
    %vm122 = vc.u32 %v116, %v118
    %v123 = vadd.s32 %v119, 1
    %v124 = vsel %vm122, %v123, %v119
    %v125 = vadd.s32 %v120, %v124
    %v126 = vadd.s32 %v125, 536870912
    %v127 = vshrl.u32 %v126, 30
    %v128 = vshll.u32 %v127, 30
    %v129 = vsub.s32 %v125, %v128
    %vm130 = vcmp.lt.s32.totalorder %v129, 0
    %v131 = vsub.s32 0, %v129
    %v132 = vsel %vm130, %v131, %v129
    %v133 = vclz %v132
    %v134 = vsub.s32 %v133, 2
    %vm135 = vcmp.gt.s32.totalorder 0, %v134
    %v136 = vsel %vm135, 0, %v134
    %v137 = vsub.s32 32, %v136
    %v138 = vshll.u32 %v129, %v136
    %v139 = vshrl.u32 %v121, %v137
    %v140 = vor.u32 %v138, %v139
    %v141 = vsub.s32 4294967266, %v136
    %v142 = vadd.s32 %v141, 127
    %v143 = vshll.u32 %v142, 23
    %v144 = vor.u32 4788187, %v143
    %v145 = vand.u32 2147483647, %v144
    %v147 = vcvt.s32.f32 %v140
    %v148 = vmul.f32 %v147, %v145
    %v149 = vxor.u32 %v148, 2147483648
    %v150 = vsel %vm67, %v149, %v148
    %v151 = vsub.s32 4, %v127
    %v152 = vsel %vm67, %v151, %v127
    %v153 = vsel %vm66, %v64, %v150
    %v154 = vsel %vm66, 0, %v152
    %v155 = vcosq.f32.pop %v153
    %v156 = vsinq.f32.pop %v153
    %vm157 = vweird.f32 %v64
    %v158 = vand.u32 %v154, 3
    %vm159 = vcmp.lt.s32.totalorder %v158, 2
    %vm160 = vcmp.eq.s32.totalorder %v158, 0
    %v161 = vxor.u32 %v156, 2147483648
    %v162 = vsel %vm160, %v155, %v161
    %vm163 = vcmp.eq.s32.totalorder %v158, 2
    %v164 = vxor.u32 %v155, 2147483648
    %v165 = vsel %vm163, %v164, %v156
    %v166 = vsel %vm159, %v162, %v165
    %v167 = vsel %vm157, nan, %v166
    %v168 = vmul.f32 %v63, %v167
    %v169 = vand.u32 2147483647, %v64
    %vm170 = vcmp.le.f32.partialorder %v169, 0.7853982
    %vm171 = vcmp.lt.s32.totalorder %v64, 0
    %v172 = vand.u32 %v64, 2139095040
    %v173 = vshrl.u32 %v172, 23
    %v174 = vsub.s32 %v173, 127
    %v175 = vand.u32 2147483647, %v64
    %v176 = vand.u32 %v175, 8388607
    %v177 = vor.u32 %v176, 8388608
    %v178 = vsub.s32 0, %v177
    %v179 = vadd.s32 %v174, 1
    %vm180 = vcmp.gt.s32.totalorder %v179, 0
    %v181 = vsel %vm180, %v179, 0
    %v182 = vshrl.u32 %v181, 5
    %v183 = vand.u32 %v181, 31
    %v184 = vsub.s32 32, %v183
    %v185 = vshrl.u32 683565275, %v184
    %v186 = vshll.u32 683565275, %v183
    %v187 = vshrl.u32 2475754826, %v184
    %v188 = vor.u32 %v186, %v187
    %v189 = vshll.u32 2475754826, %v183
    %v190 = vshrl.u32 2131351028, %v184
    %v191 = vor.u32 %v189, %v190
    %v192 = vshll.u32 2131351028, %v183
    %v193 = vshrl.u32 2102212464, %v184
    %v194 = vor.u32 %v192, %v193
    %v195 = vshll.u32 2102212464, %v183
    %v196 = vshrl.u32 920167782, %v184
    %v197 = vor.u32 %v195, %v196
    %v198 = vshll.u32 920167782, %v183
    %v199 = vshrl.u32 1326507024, %v184
    %v200 = vor.u32 %v198, %v199
    %vm201 = vcmp.lt.s32.totalorder %v182, 1
    %vm202 = vcmp.lt.s32.totalorder %v182, 2
    %vm203 = vcmp.lt.s32.totalorder %v182, 3
    %vm204 = vcmp.lt.s32.totalorder %v182, 4
    %v205 = vsel %vm201, %v185, %v188
    %v206 = vsel %vm204, %v194, 2102212464
    %v207 = vsel %vm203, %v191, %v206
    %v208 = vsel %vm202, %v205, %v207
    %v209 = vsel %vm201, %v188, %v191
    %v210 = vsel %vm204, %v197, 920167782
    %v211 = vsel %vm203, %v194, %v210
    %v212 = vsel %vm202, %v209, %v211
    %v213 = vsel %vm201, %v191, %v194
    %v214 = vsel %vm204, %v200, 1326507024
    %v215 = vsel %vm203, %v197, %v214
    %v216 = vsel %vm202, %v213, %v215
    %v217 = vshll.u32 %v177, 8
    %v218 = vmul.u32.u64.compose %v217, %v216
    %v219 = vextract.low.u32 %v218
    %v220 = vextract.high.u32 %v218
    %v221 = vmul.u32.u64.compose %v217, %v212
    %v222 = vextract.low.u32 %v221
    %v223 = vextract.high.u32 %v221
    %v224 = vmul.u32 %v217, %v208
    %v225 = vadd.s32 %v220, %v222
    %vm226 = vc.u32 %v220, %v222
    %v227 = vadd.s32 %v223, 1
    %v228 = vsel %vm226, %v227, %v223
    %v229 = vadd.s32 %v224, %v228
    %v230 = vadd.s32 %v229, 536870912
    %v231 = vshrl.u32 %v230, 30
    %v232 = vshll.u32 %v231, 30
    %v233 = vsub.s32 %v229, %v232
    %vm234 = vcmp.lt.s32.totalorder %v233, 0
    %v235 = vsub.s32 0, %v233
    %v236 = vsel %vm234, %v235, %v233
    %v237 = vclz %v236
    %v238 = vsub.s32 %v237, 2
    %vm239 = vcmp.gt.s32.totalorder 0, %v238
    %v240 = vsel %vm239, 0, %v238
    %v241 = vsub.s32 32, %v240
    %v242 = vshll.u32 %v233, %v240
    %v243 = vshrl.u32 %v225, %v241
    %v244 = vor.u32 %v242, %v243
    %v245 = vsub.s32 4294967266, %v240
    %v246 = vadd.s32 %v245, 127
    %v247 = vshll.u32 %v246, 23
    %v248 = vor.u32 4788187, %v247
    %v249 = vand.u32 2147483647, %v248
    %v251 = vcvt.s32.f32 %v244
    %v252 = vmul.f32 %v251, %v249
    %v253 = vxor.u32 %v252, 2147483648
    %v254 = vsel %vm171, %v253, %v252
    %v255 = vsub.s32 4, %v231
    %v256 = vsel %vm171, %v255, %v231
    %v257 = vsel %vm170, %v64, %v254
    %v258 = vsel %vm170, 0, %v256
    %v259 = vcosq.f32.pop %v257
    %v260 = vsinq.f32.pop %v257
    %vm261 = vweird.f32 %v64
    %v262 = vadd.s32 %v258, 3
    %v263 = vand.u32 %v262, 3
    %vm264 = vcmp.lt.s32.totalorder %v263, 2
    %vm265 = vcmp.eq.s32.totalorder %v263, 0
    %v266 = vxor.u32 %v260, 2147483648
    %v267 = vsel %vm265, %v259, %v266
    %vm268 = vcmp.eq.s32.totalorder %v263, 2
    %v269 = vxor.u32 %v259, 2147483648
    %v270 = vsel %vm268, %v269, %v260
    %v271 = vsel %vm264, %v267, %v270
    %v272 = vsel %vm261, nan, %v271
    %v273 = vmul.f32 %v63, %v272
    %v274 = vmul.f32 %v168, 3.0
    %v275 = vadd.f32 %v274, 2.0
    %s276 = scalar_lea.vmem [#allocation7], 8
    %277 = vst [vmem:[%s276] sm:$0xff] %v275
    %s278 = scalar_lea.vmem [#allocation7], 56
    %279 = vst [vmem:[%s278] sm:$0xff] %v273
    %v280 = vsub.f32 0.0, %v42
    %v281 = vmul.f32 %v280, 1.442695
    %v282 = vpow.pop %v281
    %s283 = scalar_lea.vmem [#allocation6], 32
    %v284 = vld [vmem:[%s283] sm:$0xff]
    %vm285 = vcmp.gt.f32.partialorder %v284, %v282
    %v286 = vsel %vm285, 1, 0
    %v287 = vcvt.s32.f32 %v286
    %v288 = vadd.f32 %v287, 0.0
    %s289 = scalar_lea.vmem [#allocation6], 40
    %v290 = vld [vmem:[%s289] sm:$0xff]
    %v291 = vmul.f32 %v284, %v290
    %vm292 = vcmp.gt.f32.partialorder %v291, %v282
    %v293 = vsel %vm292, 1, 0
    %v294 = vcvt.s32.f32 %v293
    %v295 = vadd.f32 %v288, %v294
    %s296 = scalar_lea.vmem [#allocation6], 48
    %v297 = vld [vmem:[%s296] sm:$0xff]
    %v298 = vmul.f32 %v291, %v297
    %vm299 = vcmp.gt.f32.partialorder %v298, %v282
    %v300 = vsel %vm299, 1, 0
    %v301 = vcvt.s32.f32 %v300
    %v302 = vadd.f32 %v295, %v301
    %s303 = scalar_lea.vmem [#allocation6], 56
    %v304 = vld [vmem:[%s303] sm:$0xff]
    %v305 = vmul.f32 %v298, %v304
    %vm306 = vcmp.gt.f32.partialorder %v305, %v282
    %v307 = vsel %vm306, 1, 0
    %v308 = vcvt.s32.f32 %v307
    %v309 = vadd.f32 %v302, %v308
    %s310 = scalar_lea.vmem [#allocation6], 64
    %v311 = vld [vmem:[%s310] sm:$0xff]
    %v312 = vmul.f32 %v305, %v311
    %vm313 = vcmp.gt.f32.partialorder %v312, %v282
    %v314 = vsel %vm313, 1, 0
    %v315 = vcvt.s32.f32 %v314
    %v316 = vadd.f32 %v309, %v315
    %s317 = scalar_lea.vmem [#allocation6], 72
    %v318 = vld [vmem:[%s317] sm:$0xff]
    %v319 = vmul.f32 %v312, %v318
    %vm320 = vcmp.gt.f32.partialorder %v319, %v282
    %v321 = vsel %vm320, 1, 0
    %v322 = vcvt.s32.f32 %v321
    %v323 = vadd.f32 %v316, %v322
    %s324 = scalar_lea.vmem [#allocation6], 80
    %v325 = vld [vmem:[%s324] sm:$0xff]
    %v326 = vmul.f32 %v319, %v325
    %vm327 = vcmp.gt.f32.partialorder %v326, %v282
    %v328 = vsel %vm327, 1, 0
    %v329 = vcvt.s32.f32 %v328
    %v330 = vadd.f32 %v323, %v329
    %s331 = scalar_lea.vmem [#allocation6], 88
    %v332 = vld [vmem:[%s331] sm:$0xff]
    %v333 = vmul.f32 %v326, %v332
    %vm334 = vcmp.gt.f32.partialorder %v333, %v282
    %v335 = vsel %vm334, 1, 0
    %v336 = vcvt.s32.f32 %v335
    %v337 = vadd.f32 %v330, %v336
    %s338 = scalar_lea.vmem [#allocation7], 16
    %339 = vst [vmem:[%s338] sm:$0xff] %v337
    %s340 = scalar_lea.vmem [#allocation6], 96
    %v341 = vld [vmem:[%s340] sm:$0xff]
    %s342 = scalar_lea.vmem [#allocation7], 24
    %343 = vst [vmem:[%s342] sm:$0xff] %v341
    %s344 = scalar_lea.vmem [#allocation6], 104
    %v345 = vld [vmem:[%s344] sm:$0xff]
    %s346 = scalar_lea.vmem [#allocation7], 32
    %347 = vst [vmem:[%s346] sm:$0xff] %v345
    %s348 = scalar_lea.vmem [#allocation6], 112
    %v349 = vld [vmem:[%s348] sm:$0xff]
    %v350 = vmul.f32 %v349, 10.0
    %v351 = vcvt.f32.s32.to.zero.pseudo %v350
    %s352 = scalar_lea.vmem [#allocation8], 8
    %353 = vst [vmem:[%s352] sm:$0xff] %v351
    %s354 = scalar_lea.vmem [#allocation6], 120
    %v355 = vld [vmem:[%s354] sm:$0xff]
    %v356 = vmul.f32 %v355, 4.0
    %v357 = vfloor.f32 %v356
    %s358 = scalar_lea.vmem [#allocation7], 40
    %359 = vst [vmem:[%s358] sm:$0xff] %v357
    %s360 = scalar_lea.vmem [#allocation6], 128
    %v361 = vld [vmem:[%s360] sm:$0xff]
    %s362 = scalar_lea.vmem [#allocation7], 48
    %363 = vst [vmem:[%s362] sm:$0xff] %v361
    %s364 = sld [smem:[#allocation2 + $0x4]]
    %p365 = scmp.lt.s32.totalorder %s364, 12905551
    %s366 = scalar_select %p365, 1, 2
    %s367 = ssub.s32 3, %s366
    %vm368 = vcmp.eq.s32.totalorder %v41, 0
    %vm369 = vcmp.eq.s32.totalorder %v41, 1
    %v370 = vstv %s367
    %v371 = vsel %vm369, %v370, 0
    %v372 = vstv %s366
    %v373 = vsel %vm368, %v372, %v371
    %374 = vst [vmem:[#allocation8] sm:$0xff] %v373
    %s375 = sld [smem:[#allocation2]]
    %s376 = sld [smem:[#allocation2 + $0x1]]
    %s377 = sld [smem:[#allocation2 + $0x2]]
    %s378 = sld [smem:[#allocation2 + $0x3]]
    %p379 = scmp.lt.s32.totalorder %s376, %s375
    %s380 = scalar_select %p379, 1, 0
    %p381 = scmp.lt.s32.totalorder %s377, %s375
    %s382 = scalar_select %p381, 1, 0
    %s383 = sadd.s32 %s380, %s382
    %p384 = scmp.lt.s32.totalorder %s378, %s375
    %s385 = scalar_select %p384, 1, 0
    %s386 = sadd.s32 %s383, %s385
    %p387 = scmp.le.s32.totalorder %s375, %s376
    %s388 = scalar_select %p387, 1, 0
    %p389 = scmp.lt.s32.totalorder %s377, %s376
    %s390 = scalar_select %p389, 1, 0
    %s391 = sadd.s32 %s388, %s390
    %p392 = scmp.lt.s32.totalorder %s378, %s376
    %s393 = scalar_select %p392, 1, 0
    %s394 = sadd.s32 %s391, %s393
    %p395 = scmp.le.s32.totalorder %s375, %s377
    %s396 = scalar_select %p395, 1, 0
    %p397 = scmp.le.s32.totalorder %s376, %s377
    %s398 = scalar_select %p397, 1, 0
    %s399 = sadd.s32 %s396, %s398
    %p400 = scmp.lt.s32.totalorder %s378, %s377
    %s401 = scalar_select %p400, 1, 0
    %s402 = sadd.s32 %s399, %s401
    %p403 = scmp.le.s32.totalorder %s375, %s378
    %s404 = scalar_select %p403, 1, 0
    %p405 = scmp.le.s32.totalorder %s376, %s378
    %s406 = scalar_select %p405, 1, 0
    %s407 = sadd.s32 %s404, %s406
    %p408 = scmp.le.s32.totalorder %s377, %s378
    %s409 = scalar_select %p408, 1, 0
    %s410 = sadd.s32 %s407, %s409
    %vm411 = vcmp.eq.s32.totalorder %v41, 2
    %vm412 = vcmp.eq.s32.totalorder %v41, 3
    %v413 = vstv %s410
    %v414 = vsel %vm412, %v413, 0
    %v415 = vstv %s402
    %v416 = vsel %vm411, %v415, %v414
    %v417 = vstv %s394
    %v418 = vsel %vm369, %v417, %v416
    %v419 = vstv %s386
    %v420 = vsel %vm368, %v419, %v418
    %s421 = scalar_lea.vmem [#allocation8], 16
    %422 = vst [vmem:[%s421] sm:$0xff] %v420
    %s423 = scalar_lea.vmem [#allocation6], 136
    %v424 = vld [vmem:[%s423] sm:$0xff]
    %vm425 = vcmp.lt.f32.partialorder %v424, 0.5
    %v426 = vsel %vm425, 1, 0
    %v427 = vcvt.s32.f32 %v426
    %s428 = scalar_lea.vmem [#allocation7], 64
    %429 = vst [vmem:[%s428] sm:$0xff] %v427
    %s430 = scalar_lea.vmem [#allocation6], 144
    %v431 = vld [vmem:[%s430] sm:$0xff]
    %v432 = vsub.f32 %v431, 0.5
    %v433 = vmul.f32 %v432, 3.1415927
    %v434 = vand.u32 2147483647, %v433
    %vm435 = vcmp.le.f32.partialorder %v434, 0.7853982
    %vm436 = vcmp.lt.s32.totalorder %v433, 0
    %v437 = vand.u32 %v433, 2139095040
    %v438 = vshrl.u32 %v437, 23
    %v439 = vsub.s32 %v438, 127
    %v440 = vand.u32 2147483647, %v433
    %v441 = vand.u32 %v440, 8388607
    %v442 = vor.u32 %v441, 8388608
    %v443 = vsub.s32 0, %v442
    %v444 = vadd.s32 %v439, 1
    %vm445 = vcmp.gt.s32.totalorder %v444, 0
    %v446 = vsel %vm445, %v444, 0
    %v447 = vshrl.u32 %v446, 5
    %v448 = vand.u32 %v446, 31
    %v449 = vsub.s32 32, %v448
    %v450 = vshrl.u32 683565275, %v449
    %v451 = vshll.u32 683565275, %v448
    %v452 = vshrl.u32 2475754826, %v449
    %v453 = vor.u32 %v451, %v452
    %v454 = vshll.u32 2475754826, %v448
    %v455 = vshrl.u32 2131351028, %v449
    %v456 = vor.u32 %v454, %v455
    %v457 = vshll.u32 2131351028, %v448
    %v458 = vshrl.u32 2102212464, %v449
    %v459 = vor.u32 %v457, %v458
    %v460 = vshll.u32 2102212464, %v448
    %v461 = vshrl.u32 920167782, %v449
    %v462 = vor.u32 %v460, %v461
    %v463 = vshll.u32 920167782, %v448
    %v464 = vshrl.u32 1326507024, %v449
    %v465 = vor.u32 %v463, %v464
    %vm466 = vcmp.lt.s32.totalorder %v447, 1
    %vm467 = vcmp.lt.s32.totalorder %v447, 2
    %vm468 = vcmp.lt.s32.totalorder %v447, 3
    %vm469 = vcmp.lt.s32.totalorder %v447, 4
    %v470 = vsel %vm466, %v450, %v453
    %v471 = vsel %vm469, %v459, 2102212464
    %v472 = vsel %vm468, %v456, %v471
    %v473 = vsel %vm467, %v470, %v472
    %v474 = vsel %vm466, %v453, %v456
    %v475 = vsel %vm469, %v462, 920167782
    %v476 = vsel %vm468, %v459, %v475
    %v477 = vsel %vm467, %v474, %v476
    %v478 = vsel %vm466, %v456, %v459
    %v479 = vsel %vm469, %v465, 1326507024
    %v480 = vsel %vm468, %v462, %v479
    %v481 = vsel %vm467, %v478, %v480
    %v482 = vshll.u32 %v442, 8
    %v483 = vmul.u32.u64.compose %v482, %v481
    %v484 = vextract.low.u32 %v483
    %v485 = vextract.high.u32 %v483
    %v486 = vmul.u32.u64.compose %v482, %v477
    %v487 = vextract.low.u32 %v486
    %v488 = vextract.high.u32 %v486
    %v489 = vmul.u32 %v482, %v473
    %v490 = vadd.s32 %v485, %v487
    %vm491 = vc.u32 %v485, %v487
    %v492 = vadd.s32 %v488, 1
    %v493 = vsel %vm491, %v492, %v488
    %v494 = vadd.s32 %v489, %v493
    %v495 = vadd.s32 %v494, 536870912
    %v496 = vshrl.u32 %v495, 30
    %v497 = vshll.u32 %v496, 30
    %v498 = vsub.s32 %v494, %v497
    %vm499 = vcmp.lt.s32.totalorder %v498, 0
    %v500 = vsub.s32 0, %v498
    %v501 = vsel %vm499, %v500, %v498
    %v502 = vclz %v501
    %v503 = vsub.s32 %v502, 2
    %vm504 = vcmp.gt.s32.totalorder 0, %v503
    %v505 = vsel %vm504, 0, %v503
    %v506 = vsub.s32 32, %v505
    %v507 = vshll.u32 %v498, %v505
    %v508 = vshrl.u32 %v490, %v506
    %v509 = vor.u32 %v507, %v508
    %v510 = vsub.s32 4294967266, %v505
    %v511 = vadd.s32 %v510, 127
    %v512 = vshll.u32 %v511, 23
    %v513 = vor.u32 4788187, %v512
    %v514 = vand.u32 2147483647, %v513
    %v516 = vcvt.s32.f32 %v509
    %v517 = vmul.f32 %v516, %v514
    %v518 = vxor.u32 %v517, 2147483648
    %v519 = vsel %vm436, %v518, %v517
    %v520 = vsub.s32 4, %v496
    %v521 = vsel %vm436, %v520, %v496
    %v522 = vsel %vm435, %v433, %v519
    %v523 = vsel %vm435, 0, %v521
    %v524 = vcosq.f32.pop %v522
    %v525 = vsinq.f32.pop %v522
    %vm526 = vweird.f32 %v433
    %v527 = vadd.s32 %v523, 3
    %v528 = vand.u32 %v527, 3
    %vm529 = vcmp.lt.s32.totalorder %v528, 2
    %vm530 = vcmp.eq.s32.totalorder %v528, 0
    %v531 = vxor.u32 %v525, 2147483648
    %v532 = vsel %vm530, %v524, %v531
    %vm533 = vcmp.eq.s32.totalorder %v528, 2
    %v534 = vxor.u32 %v524, 2147483648
    %v535 = vsel %vm533, %v534, %v525
    %v536 = vsel %vm529, %v532, %v535
    %v537 = vsel %vm526, nan, %v536
    %v538 = vand.u32 2147483647, %v433
    %vm539 = vcmp.le.f32.partialorder %v538, 0.7853982
    %vm540 = vcmp.lt.s32.totalorder %v433, 0
    %v541 = vand.u32 %v433, 2139095040
    %v542 = vshrl.u32 %v541, 23
    %v543 = vsub.s32 %v542, 127
    %v544 = vand.u32 2147483647, %v433
    %v545 = vand.u32 %v544, 8388607
    %v546 = vor.u32 %v545, 8388608
    %v547 = vsub.s32 0, %v546
    %v548 = vadd.s32 %v543, 1
    %vm549 = vcmp.gt.s32.totalorder %v548, 0
    %v550 = vsel %vm549, %v548, 0
    %v551 = vshrl.u32 %v550, 5
    %v552 = vand.u32 %v550, 31
    %v553 = vsub.s32 32, %v552
    %v554 = vshrl.u32 683565275, %v553
    %v555 = vshll.u32 683565275, %v552
    %v556 = vshrl.u32 2475754826, %v553
    %v557 = vor.u32 %v555, %v556
    %v558 = vshll.u32 2475754826, %v552
    %v559 = vshrl.u32 2131351028, %v553
    %v560 = vor.u32 %v558, %v559
    %v561 = vshll.u32 2131351028, %v552
    %v562 = vshrl.u32 2102212464, %v553
    %v563 = vor.u32 %v561, %v562
    %v564 = vshll.u32 2102212464, %v552
    %v565 = vshrl.u32 920167782, %v553
    %v566 = vor.u32 %v564, %v565
    %v567 = vshll.u32 920167782, %v552
    %v568 = vshrl.u32 1326507024, %v553
    %v569 = vor.u32 %v567, %v568
    %vm570 = vcmp.lt.s32.totalorder %v551, 1
    %vm571 = vcmp.lt.s32.totalorder %v551, 2
    %vm572 = vcmp.lt.s32.totalorder %v551, 3
    %vm573 = vcmp.lt.s32.totalorder %v551, 4
    %v574 = vsel %vm570, %v554, %v557
    %v575 = vsel %vm573, %v563, 2102212464
    %v576 = vsel %vm572, %v560, %v575
    %v577 = vsel %vm571, %v574, %v576
    %v578 = vsel %vm570, %v557, %v560
    %v579 = vsel %vm573, %v566, 920167782
    %v580 = vsel %vm572, %v563, %v579
    %v581 = vsel %vm571, %v578, %v580
    %v582 = vsel %vm570, %v560, %v563
    %v583 = vsel %vm573, %v569, 1326507024
    %v584 = vsel %vm572, %v566, %v583
    %v585 = vsel %vm571, %v582, %v584
    %v586 = vshll.u32 %v546, 8
    %v587 = vmul.u32.u64.compose %v586, %v585
    %v588 = vextract.low.u32 %v587
    %v589 = vextract.high.u32 %v587
    %v590 = vmul.u32.u64.compose %v586, %v581
    %v591 = vextract.low.u32 %v590
    %v592 = vextract.high.u32 %v590
    %v593 = vmul.u32 %v586, %v577
    %v594 = vadd.s32 %v589, %v591
    %vm595 = vc.u32 %v589, %v591
    %v596 = vadd.s32 %v592, 1
    %v597 = vsel %vm595, %v596, %v592
    %v598 = vadd.s32 %v593, %v597
    %v599 = vadd.s32 %v598, 536870912
    %v600 = vshrl.u32 %v599, 30
    %v601 = vshll.u32 %v600, 30
    %v602 = vsub.s32 %v598, %v601
    %vm603 = vcmp.lt.s32.totalorder %v602, 0
    %v604 = vsub.s32 0, %v602
    %v605 = vsel %vm603, %v604, %v602
    %v606 = vclz %v605
    %v607 = vsub.s32 %v606, 2
    %vm608 = vcmp.gt.s32.totalorder 0, %v607
    %v609 = vsel %vm608, 0, %v607
    %v610 = vsub.s32 32, %v609
    %v611 = vshll.u32 %v602, %v609
    %v612 = vshrl.u32 %v594, %v610
    %v613 = vor.u32 %v611, %v612
    %v614 = vsub.s32 4294967266, %v609
    %v615 = vadd.s32 %v614, 127
    %v616 = vshll.u32 %v615, 23
    %v617 = vor.u32 4788187, %v616
    %v618 = vand.u32 2147483647, %v617
    %v620 = vcvt.s32.f32 %v613
    %v621 = vmul.f32 %v620, %v618
    %v622 = vxor.u32 %v621, 2147483648
    %v623 = vsel %vm540, %v622, %v621
    %v624 = vsub.s32 4, %v600
    %v625 = vsel %vm540, %v624, %v600
    %v626 = vsel %vm539, %v433, %v623
    %v627 = vsel %vm539, 0, %v625
    %v628 = vcosq.f32.pop %v626
    %v629 = vsinq.f32.pop %v626
    %vm630 = vweird.f32 %v433
    %v631 = vand.u32 %v627, 3
    %vm632 = vcmp.lt.s32.totalorder %v631, 2
    %vm633 = vcmp.eq.s32.totalorder %v631, 0
    %v634 = vxor.u32 %v629, 2147483648
    %v635 = vsel %vm633, %v628, %v634
    %vm636 = vcmp.eq.s32.totalorder %v631, 2
    %v637 = vxor.u32 %v628, 2147483648
    %v638 = vsel %vm636, %v637, %v629
    %v639 = vsel %vm632, %v635, %v638
    %v640 = vsel %vm630, nan, %v639
    %v641 = vrcp.pop %v640
    %v642 = vmul.f32 %v537, %v641
    %s643 = scalar_lea.vmem [#allocation7], 72
    %644 = vst [vmem:[%s643] sm:$0xff] %v642
    %s645 = scalar_lea.vmem [#allocation6], 152
    %v646 = vld [vmem:[%s645] sm:$0xff]
    %v647 = vsub.f32 1.0, %v646
    %v648 = vlog2.pop %v647
    %v649 = vmul.f32 %v648, 0.6931472
    %v650 = vsub.f32 0.0, %v649
    %s651 = scalar_lea.vmem [#allocation7], 80
    %652 = vst [vmem:[%s651] sm:$0xff] %v650
    %s653 = scalar_lea.vmem [#allocation6], 160
    %v654 = vld [vmem:[%s653] sm:$0xff]
    %v655 = vsub.f32 1.0, %v654
    %v656 = vlog2.pop %v655
    %v657 = vmul.f32 %v656, 0.6931472
    %v658 = vmul.f32 %v657, -1.442695
    %v659 = vfloor.f32 %v658
    %v660 = vadd.f32 %v659, 1.0
    %s661 = scalar_lea.vmem [#allocation7], 88
    %662 = vst [vmem:[%s661] sm:$0xff] %v660
    %s663 = scalar_lea.vmem [#allocation6], 168
    %v664 = vld [vmem:[%s663] sm:$0xff]
    %s665 = scalar_lea.vmem [#allocation6], 176
    %v666 = vld [vmem:[%s665] sm:$0xff]
    %v667 = vsub.f32 1.0, %v664
    %v668 = vlog2.pop %v667
    %v669 = vmul.f32 %v668, 0.6931472
    %v670 = vmul.f32 %v669, -2.0
    %v671 = vrsqrt.pop %v670
    %v672 = vmul.f32 %v670, %v671
    %vm673 = vcmp.eq.f32.partialorder %v670, inf
    %v674 = vsel %vm673, %v670, %v672
    %vm675 = vcmp.eq.f32.partialorder %v670, 0.0
    %v676 = vand.u32 %v670, 2147483648
    %v677 = vsel %vm675, %v676, %v674
    %v678 = vmul.f32 %v666, 6.2831855
    %v679 = vand.u32 2147483647, %v678
    %vm680 = vcmp.le.f32.partialorder %v679, 0.7853982
    %vm681 = vcmp.lt.s32.totalorder %v678, 0
    %v682 = vand.u32 %v678, 2139095040
    %v683 = vshrl.u32 %v682, 23
    %v684 = vsub.s32 %v683, 127
    %v685 = vand.u32 2147483647, %v678
    %v686 = vand.u32 %v685, 8388607
    %v687 = vor.u32 %v686, 8388608
    %v688 = vsub.s32 0, %v687
    %v689 = vadd.s32 %v684, 1
    %vm690 = vcmp.gt.s32.totalorder %v689, 0
    %v691 = vsel %vm690, %v689, 0
    %v692 = vshrl.u32 %v691, 5
    %v693 = vand.u32 %v691, 31
    %v694 = vsub.s32 32, %v693
    %v695 = vshrl.u32 683565275, %v694
    %v696 = vshll.u32 683565275, %v693
    %v697 = vshrl.u32 2475754826, %v694
    %v698 = vor.u32 %v696, %v697
    %v699 = vshll.u32 2475754826, %v693
    %v700 = vshrl.u32 2131351028, %v694
    %v701 = vor.u32 %v699, %v700
    %v702 = vshll.u32 2131351028, %v693
    %v703 = vshrl.u32 2102212464, %v694
    %v704 = vor.u32 %v702, %v703
    %v705 = vshll.u32 2102212464, %v693
    %v706 = vshrl.u32 920167782, %v694
    %v707 = vor.u32 %v705, %v706
    %v708 = vshll.u32 920167782, %v693
    %v709 = vshrl.u32 1326507024, %v694
    %v710 = vor.u32 %v708, %v709
    %vm711 = vcmp.lt.s32.totalorder %v692, 1
    %vm712 = vcmp.lt.s32.totalorder %v692, 2
    %vm713 = vcmp.lt.s32.totalorder %v692, 3
    %vm714 = vcmp.lt.s32.totalorder %v692, 4
    %v715 = vsel %vm711, %v695, %v698
    %v716 = vsel %vm714, %v704, 2102212464
    %v717 = vsel %vm713, %v701, %v716
    %v718 = vsel %vm712, %v715, %v717
    %v719 = vsel %vm711, %v698, %v701
    %v720 = vsel %vm714, %v707, 920167782
    %v721 = vsel %vm713, %v704, %v720
    %v722 = vsel %vm712, %v719, %v721
    %v723 = vsel %vm711, %v701, %v704
    %v724 = vsel %vm714, %v710, 1326507024
    %v725 = vsel %vm713, %v707, %v724
    %v726 = vsel %vm712, %v723, %v725
    %v727 = vshll.u32 %v687, 8
    %v728 = vmul.u32.u64.compose %v727, %v726
    %v729 = vextract.low.u32 %v728
    %v730 = vextract.high.u32 %v728
    %v731 = vmul.u32.u64.compose %v727, %v722
    %v732 = vextract.low.u32 %v731
    %v733 = vextract.high.u32 %v731
    %v734 = vmul.u32 %v727, %v718
    %v735 = vadd.s32 %v730, %v732
    %vm736 = vc.u32 %v730, %v732
    %v737 = vadd.s32 %v733, 1
    %v738 = vsel %vm736, %v737, %v733
    %v739 = vadd.s32 %v734, %v738
    %v740 = vadd.s32 %v739, 536870912
    %v741 = vshrl.u32 %v740, 30
    %v742 = vshll.u32 %v741, 30
    %v743 = vsub.s32 %v739, %v742
    %vm744 = vcmp.lt.s32.totalorder %v743, 0
    %v745 = vsub.s32 0, %v743
    %v746 = vsel %vm744, %v745, %v743
    %v747 = vclz %v746
    %v748 = vsub.s32 %v747, 2
    %vm749 = vcmp.gt.s32.totalorder 0, %v748
    %v750 = vsel %vm749, 0, %v748
    %v751 = vsub.s32 32, %v750
    %v752 = vshll.u32 %v743, %v750
    %v753 = vshrl.u32 %v735, %v751
    %v754 = vor.u32 %v752, %v753
    %v755 = vsub.s32 4294967266, %v750
    %v756 = vadd.s32 %v755, 127
    %v757 = vshll.u32 %v756, 23
    %v758 = vor.u32 4788187, %v757
    %v759 = vand.u32 2147483647, %v758
    %v761 = vcvt.s32.f32 %v754
    %v762 = vmul.f32 %v761, %v759
    %v763 = vxor.u32 %v762, 2147483648
    %v764 = vsel %vm681, %v763, %v762
    %v765 = vsub.s32 4, %v741
    %v766 = vsel %vm681, %v765, %v741
    %v767 = vsel %vm680, %v678, %v764
    %v768 = vsel %vm680, 0, %v766
    %v769 = vcosq.f32.pop %v767
    %v770 = vsinq.f32.pop %v767
    %vm771 = vweird.f32 %v678
    %v772 = vand.u32 %v768, 3
    %vm773 = vcmp.lt.s32.totalorder %v772, 2
    %vm774 = vcmp.eq.s32.totalorder %v772, 0
    %v775 = vxor.u32 %v770, 2147483648
    %v776 = vsel %vm774, %v769, %v775
    %vm777 = vcmp.eq.s32.totalorder %v772, 2
    %v778 = vxor.u32 %v769, 2147483648
    %v779 = vsel %vm777, %v778, %v770
    %v780 = vsel %vm773, %v776, %v779
    %v781 = vsel %vm771, nan, %v780
    %v782 = vmul.f32 %v677, %v781
    %v783 = vand.u32 2147483647, %v678
    %vm784 = vcmp.le.f32.partialorder %v783, 0.7853982
    %vm785 = vcmp.lt.s32.totalorder %v678, 0
    %v786 = vand.u32 %v678, 2139095040
    %v787 = vshrl.u32 %v786, 23
    %v788 = vsub.s32 %v787, 127
    %v789 = vand.u32 2147483647, %v678
    %v790 = vand.u32 %v789, 8388607
    %v791 = vor.u32 %v790, 8388608
    %v792 = vsub.s32 0, %v791
    %v793 = vadd.s32 %v788, 1
    %vm794 = vcmp.gt.s32.totalorder %v793, 0
    %v795 = vsel %vm794, %v793, 0
    %v796 = vshrl.u32 %v795, 5
    %v797 = vand.u32 %v795, 31
    %v798 = vsub.s32 32, %v797
    %v799 = vshrl.u32 683565275, %v798
    %v800 = vshll.u32 683565275, %v797
    %v801 = vshrl.u32 2475754826, %v798
    %v802 = vor.u32 %v800, %v801
    %v803 = vshll.u32 2475754826, %v797
    %v804 = vshrl.u32 2131351028, %v798
    %v805 = vor.u32 %v803, %v804
    %v806 = vshll.u32 2131351028, %v797
    %v807 = vshrl.u32 2102212464, %v798
    %v808 = vor.u32 %v806, %v807
    %v809 = vshll.u32 2102212464, %v797
    %v810 = vshrl.u32 920167782, %v798
    %v811 = vor.u32 %v809, %v810
    %v812 = vshll.u32 920167782, %v797
    %v813 = vshrl.u32 1326507024, %v798
    %v814 = vor.u32 %v812, %v813
    %vm815 = vcmp.lt.s32.totalorder %v796, 1
    %vm816 = vcmp.lt.s32.totalorder %v796, 2
    %vm817 = vcmp.lt.s32.totalorder %v796, 3
    %vm818 = vcmp.lt.s32.totalorder %v796, 4
    %v819 = vsel %vm815, %v799, %v802
    %v820 = vsel %vm818, %v808, 2102212464
    %v821 = vsel %vm817, %v805, %v820
    %v822 = vsel %vm816, %v819, %v821
    %v823 = vsel %vm815, %v802, %v805
    %v824 = vsel %vm818, %v811, 920167782
    %v825 = vsel %vm817, %v808, %v824
    %v826 = vsel %vm816, %v823, %v825
    %v827 = vsel %vm815, %v805, %v808
    %v828 = vsel %vm818, %v814, 1326507024
    %v829 = vsel %vm817, %v811, %v828
    %v830 = vsel %vm816, %v827, %v829
    %v831 = vshll.u32 %v791, 8
    %v832 = vmul.u32.u64.compose %v831, %v830
    %v833 = vextract.low.u32 %v832
    %v834 = vextract.high.u32 %v832
    %v835 = vmul.u32.u64.compose %v831, %v826
    %v836 = vextract.low.u32 %v835
    %v837 = vextract.high.u32 %v835
    %v838 = vmul.u32 %v831, %v822
    %v839 = vadd.s32 %v834, %v836
    %vm840 = vc.u32 %v834, %v836
    %v841 = vadd.s32 %v837, 1
    %v842 = vsel %vm840, %v841, %v837
    %v843 = vadd.s32 %v838, %v842
    %v844 = vadd.s32 %v843, 536870912
    %v845 = vshrl.u32 %v844, 30
    %v846 = vshll.u32 %v845, 30
    %v847 = vsub.s32 %v843, %v846
    %vm848 = vcmp.lt.s32.totalorder %v847, 0
    %v849 = vsub.s32 0, %v847
    %v850 = vsel %vm848, %v849, %v847
    %v851 = vclz %v850
    %v852 = vsub.s32 %v851, 2
    %vm853 = vcmp.gt.s32.totalorder 0, %v852
    %v854 = vsel %vm853, 0, %v852
    %v855 = vsub.s32 32, %v854
    %v856 = vshll.u32 %v847, %v854
    %v857 = vshrl.u32 %v839, %v855
    %v858 = vor.u32 %v856, %v857
    %v859 = vsub.s32 4294967266, %v854
    %v860 = vadd.s32 %v859, 127
    %v861 = vshll.u32 %v860, 23
    %v862 = vor.u32 4788187, %v861
    %v863 = vand.u32 2147483647, %v862
    %v865 = vcvt.s32.f32 %v858
    %v866 = vmul.f32 %v865, %v863
    %v867 = vxor.u32 %v866, 2147483648
    %v868 = vsel %vm785, %v867, %v866
    %v869 = vsub.s32 4, %v845
    %v870 = vsel %vm785, %v869, %v845
    %v871 = vsel %vm784, %v678, %v868
    %v872 = vsel %vm784, 0, %v870
    %v873 = vcosq.f32.pop %v871
    %v874 = vsinq.f32.pop %v871
    %vm875 = vweird.f32 %v678
    %v876 = vadd.s32 %v872, 3
    %v877 = vand.u32 %v876, 3
    %vm878 = vcmp.lt.s32.totalorder %v877, 2
    %vm879 = vcmp.eq.s32.totalorder %v877, 0
    %v880 = vxor.u32 %v874, 2147483648
    %v881 = vsel %vm879, %v873, %v880
    %vm882 = vcmp.eq.s32.totalorder %v877, 2
    %v883 = vxor.u32 %v873, 2147483648
    %v884 = vsel %vm882, %v883, %v874
    %v885 = vsel %vm878, %v881, %v884
    %v886 = vsel %vm875, nan, %v885
    %v887 = vmul.f32 %v677, %v886
    %v888 = vmul.f32 %v782, 2.0
    %v889 = vadd.f32 %v888, 1.0
    %v890 = vmul.f32 %v889, 1.442695
    %v891 = vpow.pop %v890
    %s892 = scalar_lea.vmem [#allocation7], 96
    %893 = vst [vmem:[%s892] sm:$0xff] %v891
    %s894 = scalar_lea.vmem [#allocation7], 104
    %895 = vst [vmem:[%s894] sm:$0xff] %v887
    %s896 = scalar_lea.vmem [#allocation6], 184
    %v897 = vld [vmem:[%s896] sm:$0xff]
    %v898 = vmul.f32 %v897, 16777216.0
    %v899 = vfloor.f32 %v898
    %s900 = scalar_lea.vmem [#allocation7], 112
    %901 = vst [vmem:[%s900] sm:$0xff] %v899
    %s902 = scalar_lea.vmem [#allocation6], 192
    %v903 = vld [vmem:[%s902] sm:$0xff]
    %s904 = scalar_lea.vmem [#allocation7], 120
    %905 = vst [vmem:[%s904] sm:$0xff] %v903
    // Predicated region
    $region18: #{tpu_custom_call.1} parent=1 // pred_check
      _
    $region19: #{tpu_custom_call.1} parent=1 // pred_check_branch
      %907 = sbr.rel (0) target = $region21
    $region20: #{tpu_custom_call.1} parent=1 // pred_region
      %s909 = ssub.s32 2048, 2048
      %910 = vsyncadd [#allocation4], %s909
      %s911 = sshll.u32 [#allocation7], 4
      %s912 = int_to_ptr.vmem [resolvable:$true] %s911
      %917 = dma.vmem_to_hbm [thread:$0]  %s912, 2048, %s2, [#allocation4], 128, 128, 8
    $region21: #{tpu_custom_call.1} parent=1 // pred_fallthru
      _
    // Predicated region
    $region22: #{tpu_custom_call.1} parent=1 // pred_check
      _
    $region23: #{tpu_custom_call.1} parent=1 // pred_check_branch
      %919 = sbr.rel (0) target = $region25
    $region24: #{tpu_custom_call.1} parent=1 // pred_region
      %s921 = ssub.s32 384, 384
      %922 = vsyncadd [#allocation9], %s921
      %s923 = sshll.u32 [#allocation8], 4
      %s924 = int_to_ptr.vmem [resolvable:$true] %s923
      %929 = dma.vmem_to_hbm [thread:$0]  %s924, 384, %s3, [#allocation9], 128, 128, 8
    $region25: #{tpu_custom_call.1} parent=1 // pred_fallthru
      _
    // Predicated region
    $region26: #{tpu_custom_call.1} parent=1 // pred_check
      _
    $region27: #{tpu_custom_call.1} parent=1 // pred_check_branch
      %931 = sbr.rel (0) target = $region29
    $region28: #{tpu_custom_call.1} parent=1 // pred_region
      %932 = dma.done [#allocation4], 2048
    $region29: #{tpu_custom_call.1} parent=1 // pred_fallthru
      _
    // Predicated region
    $region30: #{tpu_custom_call.1} parent=1 // pred_check
      _
    $region31: #{tpu_custom_call.1} parent=1 // pred_check_branch
      %934 = sbr.rel (0) target = $region33
    $region32: #{tpu_custom_call.1} parent=1 // pred_region
      %935 = dma.done [#allocation9], 384
    $region33: #{tpu_custom_call.1} parent=1 // pred_fallthru
      _
    %936 = vsyncpa [#allocation3], 1
    %937 = vsyncpa [#allocation4], 1
    %938 = vsyncpa [#allocation9], 1
    %939 = vsyncpa [#allocation5], 1

</llo_original>
